<compile_context>
chip_gen: v7x
topology: tpu7x:2x2x1
jax: 0.10.0
libtpu: 0.0.40
codegen_flags: <defaults>
</compile_context>

<pallas_src>
import functools
import math

import jax
import jax.numpy as jnp
from jax import lax
from jax.experimental import pallas as pl
from jax.experimental.pallas import tpu as pltpu


# ----------------------------------------------------------------------------
# Fused kernel: per (batch, head) step
#   Qh = xq @ Wq[h]^T + bq[h]        (S, hd)
#   Kh = xk @ Wk[h]^T + bk[h]        (S, hd)
#   Vh = xv @ Wv[h]^T + bv[h]        (S, hd)
#   scores = (Qh Kh^T) / sqrt(hd)    (S, S)
#   scores = where(scores == 0, -inf)        (exact PyTorch semantics)
#   attn   = softmax(scores, axis=-1)        -> attention_weights output
#   acc   += (attn Vh) @ Wo^T[h*hd:(h+1)*hd] (output-projection head slice)
#   at last head: out = acc + bo
# ----------------------------------------------------------------------------
def _fused_mha_kernel(scale,
                      xq_ref, xk_ref, xv_ref,
                      wq_ref, wk_ref, wv_ref,
                      bq_ref, bk_ref, bv_ref,
                      wo_ref, bo_ref,
                      out_ref, attw_ref,
                      acc_ref):
    h = pl.program_id(1)

    @pl.when(h == 0)
    def _():
        acc_ref[...] = jnp.zeros_like(acc_ref)

    # (S, d_model) . (hd, d_model) contracting d_model -> (S, hd); no .T.
    dn = (((1,), (1,)), ((), ()))
    q = lax.dot_general(xq_ref[0], wq_ref[0], dn,
                        preferred_element_type=jnp.float32) + bq_ref[0]
    k = lax.dot_general(xk_ref[0], wk_ref[0], dn,
                        preferred_element_type=jnp.float32) + bk_ref[0]
    v = lax.dot_general(xv_ref[0], wv_ref[0], dn,
                        preferred_element_type=jnp.float32) + bv_ref[0]

    # scores = Q K^T / sqrt(hd); contraction on both minor (hd) dims.
    scores = lax.dot_general(q, k, dn,
                             preferred_element_type=jnp.float32) * scale
    scores = jnp.where(scores == 0.0, -jnp.inf, scores)

    # Numerically-stable softmax; reciprocal goes to the EUP slot.
    m = jnp.max(scores, axis=-1, keepdims=True)
    e = jnp.exp(scores - m)
    denom = jnp.sum(e, axis=-1, keepdims=True)
    attn = e * pl.reciprocal(denom, approx=True)
    attw_ref[0, 0] = attn.astype(attw_ref.dtype)

    # weighted_sum for this head, then its slice of the output projection.
    ws = jnp.dot(attn, v, preferred_element_type=jnp.float32)        # (S, hd)
    acc_ref[...] += jnp.dot(ws, wo_ref[0],
                            preferred_element_type=jnp.float32)      # (S, d)

    @pl.when(h == pl.num_programs(1) - 1)
    def _():
        out_ref[0] = (acc_ref[...] + bo_ref[...]).astype(out_ref.dtype)


# ----------------------------------------------------------------------------
# Module forward (single pallas_call)
# ----------------------------------------------------------------------------
def masked_multihead_attention(query, key, value, params, num_heads, mask=None):
    # NOTE: the reference PyTorch forward never uses `mask`; it masks where
    # the scaled scores are exactly zero.  We reproduce that exactly.
    B, Sq, d_model = query.shape
    Sk = key.shape[1]
    assert d_model % num_heads == 0
    H = num_heads
    hd = d_model // H

    # Head-h slab of a PyTorch Linear weight (d_out, d_in) = rows h*hd:(h+1)*hd.
    wq3 = params["wq"].reshape(H, hd, d_model)
    wk3 = params["wk"].reshape(H, hd, d_model)
    wv3 = params["wv"].reshape(H, hd, d_model)
    bq3 = params["bq"].reshape(H, 1, hd)
    bk3 = params["bk"].reshape(H, 1, hd)
    bv3 = params["bv"].reshape(H, 1, hd)
    # One-time host-level (d, d) transpose outside the hot loop: the head-h
    # contraction slab of fc_out becomes a contiguous (hd, d_model) block.
    wo3 = params["wo"].T.reshape(H, hd, d_model)
    bo2 = params["bo"].reshape(1, d_model)

    kernel = functools.partial(_fused_mha_kernel, 1.0 / math.sqrt(hd))

    out, attw = pl.pallas_call(
        kernel,
        out_shape=(
            jax.ShapeDtypeStruct((B, Sq, d_model), jnp.float32),
            jax.ShapeDtypeStruct((B, H, Sq, Sk), jnp.float32),
        ),
        grid=(B, H),                              # head = innermost reduction
        in_specs=[
            pl.BlockSpec((1, Sq, d_model), lambda b, h: (b, 0, 0)),  # query
            pl.BlockSpec((1, Sk, d_model), lambda b, h: (b, 0, 0)),  # key
            pl.BlockSpec((1, Sk, d_model), lambda b, h: (b, 0, 0)),  # value
            pl.BlockSpec((1, hd, d_model), lambda b, h: (h, 0, 0)),  # Wq slab
            pl.BlockSpec((1, hd, d_model), lambda b, h: (h, 0, 0)),  # Wk slab
            pl.BlockSpec((1, hd, d_model), lambda b, h: (h, 0, 0)),  # Wv slab
            pl.BlockSpec((1, 1, hd),       lambda b, h: (h, 0, 0)),  # bq
            pl.BlockSpec((1, 1, hd),       lambda b, h: (h, 0, 0)),  # bk
            pl.BlockSpec((1, 1, hd),       lambda b, h: (h, 0, 0)),  # bv
            pl.BlockSpec((1, hd, d_model), lambda b, h: (h, 0, 0)),  # Wo^T slab
            pl.BlockSpec((1, d_model),     lambda b, h: (0, 0)),     # bo
        ],
        out_specs=(
            pl.BlockSpec((1, Sq, d_model), lambda b, h: (b, 0, 0)),  # output
            pl.BlockSpec((1, 1, Sq, Sk),   lambda b, h: (b, h, 0, 0)),  # attw
        ),
        scratch_shapes=[pltpu.VMEM((Sq, d_model), jnp.float32)],
        compiler_params=pltpu.CompilerParams(
            dimension_semantics=("parallel", "arbitrary")),
    )(query, key, value, wq3, wk3, wv3, bq3, bk3, bv3, wo3, bo2)
    return out, attw


# ----------------------------------------------------------------------------
# Params / reference (for self-check)
# ----------------------------------------------------------------------------
def init_params(key, d_model):
    # Deterministic PyTorch-Linear-like init: U(-1/sqrt(in), 1/sqrt(in)).
    bound = 1.0 / math.sqrt(d_model)
    keys = jax.random.split(key, 8)
    names = ["wq", "bq", "wk", "bk", "wv", "bv", "wo", "bo"]
    params = {}
    for i, name in enumerate(names):
        shape = (d_model, d_model) if name.startswith("w") else (d_model,)
        params[name] = jax.random.uniform(
            keys[i], shape, jnp.float32, minval=-bound, maxval=bound)
    return params


def _ref_forward(query, key, value, params, num_heads):
    """Pure-JAX reference mirroring the PyTorch module."""
    B, Sq, d = query.shape
    hd = d // num_heads

    def lin(x, w, b):
        return x @ w.T + b

    def split(x):
        return x.reshape(B, -1, num_heads, hd).transpose(0, 2, 1, 3)

    Q = split(lin(query, params["wq"], params["bq"]))
    K = split(lin(key, params["wk"], params["bk"]))
    V = split(lin(value, params["wv"], params["bv"]))
    scores = jnp.einsum("bhqd,bhkd->bhqk", Q, K) / math.sqrt(hd)
    scores = jnp.where(scores == 0.0, -jnp.inf, scores)
    attw = jax.nn.softmax(scores, axis=-1)
    ws = jnp.einsum("bhqk,bhkd->bhqd", attw, V)
    ws = ws.transpose(0, 2, 1, 3).reshape(B, Sq, d)
    return lin(ws, params["wo"], params["bo"]), attw


if __name__ == "__main__":
    B, S, d_model, num_heads = 2, 8, 32, 4

    root = jax.random.PRNGKey(0)
    k_q, k_k, k_v, k_p = jax.random.split(root, 4)

    query = jax.random.normal(k_q, (B, S, d_model), jnp.float32)
    key_in = jax.random.normal(k_k, (B, S, d_model), jnp.float32)
    value = jax.random.normal(k_v, (B, S, d_model), jnp.float32)
    params = init_params(k_p, d_model)

    output, attn_w = masked_multihead_attention(
        query, key_in, value, params, num_heads)
    jax.block_until_ready(output)
    jax.block_until_ready(attn_w)

    assert output.shape == (B, S, d_model)
    assert attn_w.shape == (B, num_heads, S, S)

    # Loose-tolerance self-check (pl.reciprocal(approx=True) introduces tiny
    # numeric deviations vs. the exact reference).
    ref_out, ref_attw = _ref_forward(query, key_in, value, params, num_heads)
    assert jnp.allclose(attn_w, ref_attw, rtol=2e-2, atol=2e-2)
    assert jnp.allclose(output, ref_out, rtol=2e-2, atol=2e-2)

    print("KERNEL_OK")
</pallas_src>

<mosaic_0001>
module attributes {stable_mosaic.version = 11 : i64} {
  func.func @_fused_mha_kernel(%arg0: i32, %arg1: i32, %arg2: memref<1x8x32xf32, #tpu.memory_space<vmem>>, %arg3: memref<1x8x32xf32, #tpu.memory_space<vmem>>, %arg4: memref<1x8x32xf32, #tpu.memory_space<vmem>>, %arg5: memref<1x8x32xf32, #tpu.memory_space<vmem>>, %arg6: memref<1x8x32xf32, #tpu.memory_space<vmem>>, %arg7: memref<1x8x32xf32, #tpu.memory_space<vmem>>, %arg8: memref<1x1x8xf32, #tpu.memory_space<vmem>>, %arg9: memref<1x1x8xf32, #tpu.memory_space<vmem>>, %arg10: memref<1x1x8xf32, #tpu.memory_space<vmem>>, %arg11: memref<1x8x32xf32, #tpu.memory_space<vmem>>, %arg12: memref<1x32xf32, #tpu.memory_space<vmem>>, %arg13: memref<1x8x32xf32, #tpu.memory_space<vmem>>, %arg14: memref<1x1x8x8xf32, #tpu.memory_space<vmem>>, %arg15: memref<8x32xf32, #tpu.memory_space<vmem>>) attributes {dimension_semantics = [#tpu.dimension_semantics<parallel>, #tpu.dimension_semantics<arbitrary>], iteration_bounds = array<i64: 2, 4>, scalar_prefetch = 0 : i64, scratch_operands = 1 : i64, tpu.core_type = #tpu.core_type<tc>, window_params = [{transform_indices = @transform_0, window_bounds = array<i64: 1, 8, 32>}, {transform_indices = @transform_1, window_bounds = array<i64: 1, 8, 32>}, {transform_indices = @transform_2, window_bounds = array<i64: 1, 8, 32>}, {transform_indices = @transform_3, window_bounds = array<i64: 1, 8, 32>}, {transform_indices = @transform_4, window_bounds = array<i64: 1, 8, 32>}, {transform_indices = @transform_5, window_bounds = array<i64: 1, 8, 32>}, {transform_indices = @transform_6, window_bounds = array<i64: 1, 1, 8>}, {transform_indices = @transform_7, window_bounds = array<i64: 1, 1, 8>}, {transform_indices = @transform_8, window_bounds = array<i64: 1, 1, 8>}, {transform_indices = @transform_9, window_bounds = array<i64: 1, 8, 32>}, {pipeline_mode = #tpu.pipeline_mode<synchronous>, transform_indices = @transform_10, window_bounds = array<i64: 1, 32>}, {transform_indices = @transform_11, window_bounds = array<i64: 1, 8, 32>}, {transform_indices = @transform_12, window_bounds = array<i64: 1, 1, 8, 8>}]} {
    %c0_i32 = arith.constant 0 : i32
    %0 = arith.cmpi eq, %arg1, %c0_i32 : i32
    %1 = arith.extui %0 : i1 to i32
    %c0_i32_0 = arith.constant 0 : i32
    %2 = arith.cmpi ne, %1, %c0_i32_0 : i32
    scf.if %2 {
      %cst_49 = arith.constant 0.000000e+00 : f32
      %60 = vector.broadcast %cst_49 : f32 to vector<8x32xf32>
      %c0_50 = arith.constant 0 : index
      %c0_51 = arith.constant 0 : index
      %61 = vector.load %arg15[%c0_50, %c0_51] : memref<8x32xf32, #tpu.memory_space<vmem>>, vector<8x32xf32>
      tpu.vector_store %arg15[%c0_50, %c0_51], %60 {strides = array<i32>} : memref<8x32xf32, #tpu.memory_space<vmem>>, vector<8x32xf32>,
    } else {
    }
    %c0 = arith.constant 0 : index
    %c0_1 = arith.constant 0 : index
    %c0_2 = arith.constant 0 : index
    %3 = vector.load %arg2[%c0, %c0_1, %c0_2] : memref<1x8x32xf32, #tpu.memory_space<vmem>>, vector<1x8x32xf32>
    %4 = vector.shape_cast %3 : vector<1x8x32xf32> to vector<8x32xf32>
    %c0_3 = arith.constant 0 : index
    %c0_4 = arith.constant 0 : index
    %c0_5 = arith.constant 0 : index
    %5 = vector.load %arg5[%c0_3, %c0_4, %c0_5] : memref<1x8x32xf32, #tpu.memory_space<vmem>>, vector<1x8x32xf32>
    %6 = vector.shape_cast %5 : vector<1x8x32xf32> to vector<8x32xf32>
    %cst = arith.constant dense<0.000000e+00> : vector<8x8xf32>
    %7 = tpu.matmul %4, %6, %cst {dimension_numbers = #tpu.dot_dimension_numbers<[1], [1], [0], [0], [0, 0, 1, 0], [], []>} : vector<8x32xf32>, vector<8x32xf32>, vector<8x8xf32> -> vector<8x8xf32>
    %c0_6 = arith.constant 0 : index
    %c0_7 = arith.constant 0 : index
    %c0_8 = arith.constant 0 : index
    %8 = vector.load %arg8[%c0_6, %c0_7, %c0_8] : memref<1x1x8xf32, #tpu.memory_space<vmem>>, vector<1x1x8xf32>
    %9 = vector.shape_cast %8 : vector<1x1x8xf32> to vector<1x8xf32>
    %10 = vector.broadcast %9 : vector<1x8xf32> to vector<8x8xf32>
    %11 = arith.addf %7, %10 : vector<8x8xf32>
    %c0_9 = arith.constant 0 : index
    %c0_10 = arith.constant 0 : index
    %c0_11 = arith.constant 0 : index
    %12 = vector.load %arg3[%c0_9, %c0_10, %c0_11] : memref<1x8x32xf32, #tpu.memory_space<vmem>>, vector<1x8x32xf32>
    %13 = vector.shape_cast %12 : vector<1x8x32xf32> to vector<8x32xf32>
    %c0_12 = arith.constant 0 : index
    %c0_13 = arith.constant 0 : index
    %c0_14 = arith.constant 0 : index
    %14 = vector.load %arg6[%c0_12, %c0_13, %c0_14] : memref<1x8x32xf32, #tpu.memory_space<vmem>>, vector<1x8x32xf32>
    %15 = vector.shape_cast %14 : vector<1x8x32xf32> to vector<8x32xf32>
    %cst_15 = arith.constant dense<0.000000e+00> : vector<8x8xf32>
    %16 = tpu.matmul %13, %15, %cst_15 {dimension_numbers = #tpu.dot_dimension_numbers<[1], [1], [0], [0], [0, 0, 1, 0], [], []>} : vector<8x32xf32>, vector<8x32xf32>, vector<8x8xf32> -> vector<8x8xf32>
    %c0_16 = arith.constant 0 : index
    %c0_17 = arith.constant 0 : index
    %c0_18 = arith.constant 0 : index
    %17 = vector.load %arg9[%c0_16, %c0_17, %c0_18] : memref<1x1x8xf32, #tpu.memory_space<vmem>>, vector<1x1x8xf32>
    %18 = vector.shape_cast %17 : vector<1x1x8xf32> to vector<1x8xf32>
    %19 = vector.broadcast %18 : vector<1x8xf32> to vector<8x8xf32>
    %20 = arith.addf %16, %19 : vector<8x8xf32>
    %c0_19 = arith.constant 0 : index
    %c0_20 = arith.constant 0 : index
    %c0_21 = arith.constant 0 : index
    %21 = vector.load %arg4[%c0_19, %c0_20, %c0_21] : memref<1x8x32xf32, #tpu.memory_space<vmem>>, vector<1x8x32xf32>
    %22 = vector.shape_cast %21 : vector<1x8x32xf32> to vector<8x32xf32>
    %c0_22 = arith.constant 0 : index
    %c0_23 = arith.constant 0 : index
    %c0_24 = arith.constant 0 : index
    %23 = vector.load %arg7[%c0_22, %c0_23, %c0_24] : memref<1x8x32xf32, #tpu.memory_space<vmem>>, vector<1x8x32xf32>
    %24 = vector.shape_cast %23 : vector<1x8x32xf32> to vector<8x32xf32>
    %cst_25 = arith.constant dense<0.000000e+00> : vector<8x8xf32>
    %25 = tpu.matmul %22, %24, %cst_25 {dimension_numbers = #tpu.dot_dimension_numbers<[1], [1], [0], [0], [0, 0, 1, 0], [], []>} : vector<8x32xf32>, vector<8x32xf32>, vector<8x8xf32> -> vector<8x8xf32>
    %c0_26 = arith.constant 0 : index
    %c0_27 = arith.constant 0 : index
    %c0_28 = arith.constant 0 : index
    %26 = vector.load %arg10[%c0_26, %c0_27, %c0_28] : memref<1x1x8xf32, #tpu.memory_space<vmem>>, vector<1x1x8xf32>
    %27 = vector.shape_cast %26 : vector<1x1x8xf32> to vector<1x8xf32>
    %28 = vector.broadcast %27 : vector<1x8xf32> to vector<8x8xf32>
    %29 = arith.addf %25, %28 : vector<8x8xf32>
    %cst_29 = arith.constant dense<0.000000e+00> : vector<8x8xf32>
    %30 = tpu.matmul %11, %20, %cst_29 {dimension_numbers = #tpu.dot_dimension_numbers<[1], [1], [0], [0], [0, 0, 1, 0], [], []>} : vector<8x8xf32>, vector<8x8xf32>, vector<8x8xf32> -> vector<8x8xf32>
    %cst_30 = arith.constant 0.353553385 : f32
    %31 = vector.broadcast %cst_30 : f32 to vector<8x8xf32>
    %32 = arith.mulf %30, %31 : vector<8x8xf32>
    %cst_31 = arith.constant 0.000000e+00 : f32
    %33 = vector.broadcast %cst_31 : f32 to vector<8x8xf32>
    %34 = arith.cmpf oeq, %32, %33 : vector<8x8xf32>
    %cst_32 = arith.constant 0xFF800000 : f32
    %35 = vector.broadcast %cst_32 : f32 to vector<8x8xf32>
    %36 = arith.select %34, %35, %32 : vector<8x8xi1>, vector<8x8xf32>
    %cst_33 = arith.constant dense<0xFF800000> : vector<8xf32>
    %37 = vector.multi_reduction <maximumf>, %36, %cst_33 [1] : vector<8x8xf32> to vector<8xf32>
    %38 = vector.shape_cast %37 : vector<8xf32> to vector<8x1xf32>
    %39 = vector.broadcast %38 : vector<8x1xf32> to vector<8x8xf32>
    %40 = arith.subf %36, %39 : vector<8x8xf32>
    %41 = math.exp %40 : vector<8x8xf32>
    %cst_34 = arith.constant dense<0.000000e+00> : vector<8xf32>
    %42 = vector.multi_reduction <add>, %41, %cst_34 [1] : vector<8x8xf32> to vector<8xf32>
    %43 = vector.shape_cast %42 : vector<8xf32> to vector<8x1xf32>
    %44 = tpu.reciprocal %43 {approx = true} : vector<8x1xf32> -> vector<8x1xf32>
    %45 = vector.broadcast %44 : vector<8x1xf32> to vector<8x8xf32>
    %46 = arith.mulf %41, %45 : vector<8x8xf32>
    %c0_35 = arith.constant 0 : index
    %c0_36 = arith.constant 0 : index
    %c0_37 = arith.constant 0 : index
    %c0_38 = arith.constant 0 : index
    %47 = vector.load %arg14[%c0_35, %c0_36, %c0_37, %c0_38] : memref<1x1x8x8xf32, #tpu.memory_space<vmem>>, vector<1x1x8x8xf32>
    %48 = vector.shape_cast %47 : vector<1x1x8x8xf32> to vector<8x8xf32>
    %49 = vector.shape_cast %46 : vector<8x8xf32> to vector<1x1x8x8xf32>
    tpu.vector_store %arg14[%c0_35, %c0_36, %c0_37, %c0_38], %49 {strides = array<i32>} : memref<1x1x8x8xf32, #tpu.memory_space<vmem>>, vector<1x1x8x8xf32>,
    %cst_39 = arith.constant dense<0.000000e+00> : vector<8x8xf32>
    %50 = tpu.matmul %46, %29, %cst_39 {dimension_numbers = #tpu.dot_dimension_numbers<[1], [0], [0], [1], [0, 0, 1, 1], [], []>} : vector<8x8xf32>, vector<8x8xf32>, vector<8x8xf32> -> vector<8x8xf32>
    %c0_40 = arith.constant 0 : index
    %c0_41 = arith.constant 0 : index
    %51 = vector.load %arg15[%c0_40, %c0_41] : memref<8x32xf32, #tpu.memory_space<vmem>>, vector<8x32xf32>
    %c0_42 = arith.constant 0 : index
    %c0_43 = arith.constant 0 : index
    %c0_44 = arith.constant 0 : index
    %52 = vector.load %arg11[%c0_42, %c0_43, %c0_44] : memref<1x8x32xf32, #tpu.memory_space<vmem>>, vector<1x8x32xf32>
    %53 = vector.shape_cast %52 : vector<1x8x32xf32> to vector<8x32xf32>
    %cst_45 = arith.constant dense<0.000000e+00> : vector<8x32xf32>
    %54 = tpu.matmul %50, %53, %cst_45 {dimension_numbers = #tpu.dot_dimension_numbers<[1], [0], [0], [1], [0, 0, 1, 1], [], []>} : vector<8x8xf32>, vector<8x32xf32>, vector<8x32xf32> -> vector<8x32xf32>
    %55 = arith.addf %51, %54 : vector<8x32xf32>
    %c0_46 = arith.constant 0 : index
    %c0_47 = arith.constant 0 : index
    %56 = vector.load %arg15[%c0_46, %c0_47] : memref<8x32xf32, #tpu.memory_space<vmem>>, vector<8x32xf32>
    tpu.vector_store %arg15[%c0_46, %c0_47], %55 {strides = array<i32>} : memref<8x32xf32, #tpu.memory_space<vmem>>, vector<8x32xf32>,
    %c3_i32 = arith.constant 3 : i32
    %57 = arith.cmpi eq, %arg1, %c3_i32 : i32
    %58 = arith.extui %57 : i1 to i32
    %c0_i32_48 = arith.constant 0 : i32
    %59 = arith.cmpi ne, %58, %c0_i32_48 : i32
    scf.if %59 {
      %c0_49 = arith.constant 0 : index
      %c0_50 = arith.constant 0 : index
      %60 = vector.load %arg15[%c0_49, %c0_50] : memref<8x32xf32, #tpu.memory_space<vmem>>, vector<8x32xf32>
      %c0_51 = arith.constant 0 : index
      %c0_52 = arith.constant 0 : index
      %61 = vector.load %arg12[%c0_51, %c0_52] : memref<1x32xf32, #tpu.memory_space<vmem>>, vector<1x32xf32>
      %62 = vector.broadcast %61 : vector<1x32xf32> to vector<8x32xf32>
      %63 = arith.addf %60, %62 : vector<8x32xf32>
      %c0_53 = arith.constant 0 : index
      %c0_54 = arith.constant 0 : index
      %c0_55 = arith.constant 0 : index
      %64 = vector.load %arg13[%c0_53, %c0_54, %c0_55] : memref<1x8x32xf32, #tpu.memory_space<vmem>>, vector<1x8x32xf32>
      %65 = vector.shape_cast %64 : vector<1x8x32xf32> to vector<8x32xf32>
      %66 = vector.shape_cast %63 : vector<8x32xf32> to vector<1x8x32xf32>
      tpu.vector_store %arg13[%c0_53, %c0_54, %c0_55], %66 {strides = array<i32>} : memref<1x8x32xf32, #tpu.memory_space<vmem>>, vector<1x8x32xf32>,
    } else {
    }
    return
  }
  func.func @transform_0(%arg0: i32, %arg1: i32) -> (i32, i32, i32) {
    %c0_i32 = arith.constant 0 : i32
    %c0_i32_0 = arith.constant 0 : i32
    %c0_i32_1 = arith.constant 0 : i32
    return %arg0, %c0_i32, %c0_i32_0 : i32, i32, i32
  }
  func.func @transform_1(%arg0: i32, %arg1: i32) -> (i32, i32, i32) {
    %c0_i32 = arith.constant 0 : i32
    %c0_i32_0 = arith.constant 0 : i32
    %c0_i32_1 = arith.constant 0 : i32
    return %arg0, %c0_i32, %c0_i32_0 : i32, i32, i32
  }
  func.func @transform_2(%arg0: i32, %arg1: i32) -> (i32, i32, i32) {
    %c0_i32 = arith.constant 0 : i32
    %c0_i32_0 = arith.constant 0 : i32
    %c0_i32_1 = arith.constant 0 : i32
    return %arg0, %c0_i32, %c0_i32_0 : i32, i32, i32
  }
  func.func @transform_3(%arg0: i32, %arg1: i32) -> (i32, i32, i32) {
    %c0_i32 = arith.constant 0 : i32
    %c0_i32_0 = arith.constant 0 : i32
    %c0_i32_1 = arith.constant 0 : i32
    return %arg1, %c0_i32, %c0_i32_0 : i32, i32, i32
  }
  func.func @transform_4(%arg0: i32, %arg1: i32) -> (i32, i32, i32) {
    %c0_i32 = arith.constant 0 : i32
    %c0_i32_0 = arith.constant 0 : i32
    %c0_i32_1 = arith.constant 0 : i32
    return %arg1, %c0_i32, %c0_i32_0 : i32, i32, i32
  }
  func.func @transform_5(%arg0: i32, %arg1: i32) -> (i32, i32, i32) {
    %c0_i32 = arith.constant 0 : i32
    %c0_i32_0 = arith.constant 0 : i32
    %c0_i32_1 = arith.constant 0 : i32
    return %arg1, %c0_i32, %c0_i32_0 : i32, i32, i32
  }
  func.func @transform_6(%arg0: i32, %arg1: i32) -> (i32, i32, i32) {
    %c0_i32 = arith.constant 0 : i32
    %c0_i32_0 = arith.constant 0 : i32
    %c0_i32_1 = arith.constant 0 : i32
    return %arg1, %c0_i32, %c0_i32_0 : i32, i32, i32
  }
  func.func @transform_7(%arg0: i32, %arg1: i32) -> (i32, i32, i32) {
    %c0_i32 = arith.constant 0 : i32
    %c0_i32_0 = arith.constant 0 : i32
    %c0_i32_1 = arith.constant 0 : i32
    return %arg1, %c0_i32, %c0_i32_0 : i32, i32, i32
  }
  func.func @transform_8(%arg0: i32, %arg1: i32) -> (i32, i32, i32) {
    %c0_i32 = arith.constant 0 : i32
    %c0_i32_0 = arith.constant 0 : i32
    %c0_i32_1 = arith.constant 0 : i32
    return %arg1, %c0_i32, %c0_i32_0 : i32, i32, i32
  }
  func.func @transform_9(%arg0: i32, %arg1: i32) -> (i32, i32, i32) {
    %c0_i32 = arith.constant 0 : i32
    %c0_i32_0 = arith.constant 0 : i32
    %c0_i32_1 = arith.constant 0 : i32
    return %arg1, %c0_i32, %c0_i32_0 : i32, i32, i32
  }
  func.func @transform_10(%arg0: i32, %arg1: i32) -> (i32, i32) {
    %c0_i32 = arith.constant 0 : i32
    %c0_i32_0 = arith.constant 0 : i32
    %c0_i32_1 = arith.constant 0 : i32
    return %c0_i32, %c0_i32_0 : i32, i32
  }
  func.func @transform_11(%arg0: i32, %arg1: i32) -> (i32, i32, i32) {
    %c0_i32 = arith.constant 0 : i32
    %c0_i32_0 = arith.constant 0 : i32
    %c0_i32_1 = arith.constant 0 : i32
    return %arg0, %c0_i32, %c0_i32_0 : i32, i32, i32
  }
  func.func @transform_12(%arg0: i32, %arg1: i32) -> (i32, i32, i32, i32) {
    %c0_i32 = arith.constant 0 : i32
    %c0_i32_0 = arith.constant 0 : i32
    %c0_i32_1 = arith.constant 0 : i32
    return %arg0, %arg1, %c0_i32, %c0_i32_0 : i32, i32, i32, i32
  }
}

</mosaic_0001>

<llo_original>
// kernel: tpu_custom_call.1
$region0: #{tpu_custom_call.1}
  #allocation0 [shape = 'u32[]', space=smem, size = 0x4, offset = 0x4, fixed_abs, tag = 'smem constant byte address 0x4 - core index']
  #allocation1 [shape = 'u32[144,128]{1,0:T(1,128)}', space=vmem, size = 0x12000, scoped, tag = 'internal scratch']
  #allocation2 [shape = 'f32[8,32]{1,0:T(8,128)}', space=vmem, size = 0x1000, scoped, tag = 'scratch operand']
  %s0 = inlined_call_operand.hbm [shape: f32[2,8,32], index: 0, kind: input, shape index: {}]
  %s1 = inlined_call_operand.hbm [shape: f32[2,8,32], index: 1, kind: input, shape index: {}]
  %s2 = inlined_call_operand.hbm [shape: f32[2,8,32], index: 2, kind: input, shape index: {}]
  %s3 = inlined_call_operand.hbm [shape: f32[4,8,32], index: 3, kind: input, shape index: {}]
  %s4 = inlined_call_operand.hbm [shape: f32[4,8,32], index: 4, kind: input, shape index: {}]
  %s5 = inlined_call_operand.hbm [shape: f32[4,8,32], index: 5, kind: input, shape index: {}]
  %s6 = inlined_call_operand.hbm [shape: f32[4,1,8], index: 6, kind: input, shape index: {}]
  %s7 = inlined_call_operand.hbm [shape: f32[4,1,8], index: 7, kind: input, shape index: {}]
  %s8 = inlined_call_operand.hbm [shape: f32[4,1,8], index: 8, kind: input, shape index: {}]
  %s9 = inlined_call_operand.vmem [shape: f32[4,8,32], index: 9, kind: input, shape index: {}]
  %s10 = inlined_call_operand.vmem [shape: f32[1,32], index: 10, kind: input, shape index: {}]
  %s11 = inlined_call_operand.hbm [shape: f32[2,8,32], index: 11, kind: output, shape index: {0}]
  %s12 = inlined_call_operand.hbm [shape: f32[2,4,8,8], index: 12, kind: output, shape index: {1}]
  %13 = xla_tuple %s11, %s12
  %s14 = sld [smem:[#allocation0]]
  $region129: #{tpu_custom_call.1} parent=0
    _
  %s16 = ssub.s32 1, %s14
  %s17 = scalar_select 0, %s16, %s14
  $region1: #{tpu_custom_call.1} parent=0
    #allocation3 [shape = 'u8[8192]{0}', space=vmem, size = 0x2000, scoped, tag = 'input window, operand 0']
    #allocation4 [shape = 's32[2]{0}', space=sflag, size = 0x8, scoped, tag = 'scoped memory for tpu_custom_call.1']
    #allocation5 [shape = 's32[2]{0}', space=sflag, size = 0x8, scoped, tag = 'scoped memory for tpu_custom_call.1']
    #allocation6 [shape = 'u8[8192]{0}', space=vmem, size = 0x2000, scoped, tag = 'input window, operand 1']
    #allocation7 [shape = 's32[2]{0}', space=sflag, size = 0x8, scoped, tag = 'scoped memory for tpu_custom_call.1']
    #allocation8 [shape = 'u8[8192]{0}', space=vmem, size = 0x2000, scoped, tag = 'input window, operand 2']
    #allocation9 [shape = 'u8[8192]{0}', space=vmem, size = 0x2000, scoped, tag = 'input window, operand 3']
    #allocation10 [shape = 's32[2]{0}', space=sflag, size = 0x8, scoped, tag = 'scoped memory for tpu_custom_call.1']
    #allocation11 [shape = 'u8[8192]{0}', space=vmem, size = 0x2000, scoped, tag = 'input window, operand 4']
    #allocation12 [shape = 'u8[8192]{0}', space=vmem, size = 0x2000, scoped, tag = 'input window, operand 5']
    #allocation13 [shape = 's32[2]{0}', space=sflag, size = 0x8, scoped, tag = 'scoped memory for tpu_custom_call.1']
    #allocation14 [shape = 'u8[1024]{0}', space=vmem, size = 0x400, scoped, tag = 'input window, operand 6']
    #allocation15 [shape = 'u8[1024]{0}', space=vmem, size = 0x400, scoped, tag = 'input window, operand 7']
    #allocation16 [shape = 's32[2]{0}', space=sflag, size = 0x8, scoped, tag = 'scoped memory for tpu_custom_call.1']
    #allocation17 [shape = 'u8[1024]{0}', space=vmem, size = 0x400, scoped, tag = 'input window, operand 8']
    #allocation18 [shape = 'u8[8192]{0}', space=vmem, size = 0x2000, scoped, tag = 'output window, operand 0']
    #allocation19 [shape = 'u8[8192]{0}', space=vmem, size = 0x2000, scoped, tag = 'output window, operand 1']
    #allocation20 [shape = 's32[2]{0}', space=sflag, size = 0x8, scoped, tag = 'scoped memory for tpu_custom_call.1']
    %18 = vsyncpa [#allocation4], 0
    %s19 = scalar_lea.sflag [#allocation4], 1
    %20 = vsyncpa %s19, 0
    %21 = vsyncpa [#allocation7], 0
    %s22 = scalar_lea.sflag [#allocation7], 1
    %23 = vsyncpa %s22, 0
    %24 = vsyncpa [#allocation10], 0
    %s25 = scalar_lea.sflag [#allocation10], 1
    %26 = vsyncpa %s25, 0
    %27 = vsyncpa [#allocation13], 0
    %s28 = scalar_lea.sflag [#allocation13], 1
    %29 = vsyncpa %s28, 0
    %30 = vsyncpa [#allocation16], 0
    %s31 = scalar_lea.sflag [#allocation16], 1
    %32 = vsyncpa %s31, 0
    %33 = vsyncpa [#allocation5], 0
    %s34 = scalar_lea.sflag [#allocation5], 1
    %35 = vsyncpa %s34, 0
    %36 = vsyncpa [#allocation20], 0
    %s37 = scalar_lea.sflag [#allocation20], 1
    %38 = vsyncpa %s37, 0
    loop: start=0, step=1, limit=10
    $region2: #{tpu_custom_call.1} parent=1 // loop_pre_header
      _
    $region3: #{tpu_custom_call.1} parent=1 // loop_header
      %s40 = sphi 0, %s44
      %p41 = scmp.ge.s32.totalorder %s40, 10
      %s47 = sphi 0, %s59
      %s48 = sphi 0, %s55
      %s49 = sphi 0, %s47
      %s50 = sphi 0, %s48
      %s51 = sphi 0, %s49
      %s52 = sphi 0, %s50
      %s62 = sphi 0, %s64
      %s65 = sphi 0, %s62
      %s66 = sphi 0, %s65
      %s82 = sphi 0, %s66
      %s88 = sphi 0, %s90
      %s91 = sphi 0, %s88
      %s92 = sphi 0, %s91
      %s108 = sphi 0, %s92
      %s114 = sphi 0, %s116
      %s117 = sphi 0, %s114
      %s118 = sphi 0, %s117
      %s134 = sphi 0, %s118
      %s140 = sphi 0, %s142
      %s143 = sphi 0, %s140
      %s144 = sphi 0, %s143
      %s160 = sphi 0, %s144
      %s166 = sphi 0, %s168
      %s169 = sphi 0, %s166
      %s170 = sphi 0, %s169
      %s186 = sphi 0, %s170
      %s192 = sphi 0, %s194
      %s195 = sphi 0, %s192
      %s196 = sphi 0, %s195
      %s212 = sphi 0, %s196
      %s218 = sphi 0, %s220
      %s221 = sphi 0, %s218
      %s222 = sphi 0, %s221
      %s238 = sphi 0, %s222
      %s244 = sphi 0, %s246
      %s247 = sphi 0, %s244
      %s248 = sphi 0, %s247
      %s264 = sphi 0, %s248
      %s270 = sphi 0, %s272
      %s273 = sphi 0, %s270
      %s274 = sphi 0, %s273
      %s290 = sphi 0, %s274
      %s296 = sphi 0, %s298
      %s299 = sphi 0, %s296
      %s300 = sphi 0, %s299
      %s316 = sphi 0, %s300
      %s320 = sphi 0, %s320
      %s322 = sphi 0, %s320
      %s323 = sphi 0, %s322
      %s337 = sphi 0, %s323
      %s343 = sphi 0, %s345
      %s346 = sphi 0, %s343
      %s347 = sphi 0, %s346
      %s363 = sphi 0, %s347
      %s371 = sphi 0, %s373
      %s374 = sphi 0, %s371
      %s375 = sphi 0, %s374
      %s391 = sphi 0, %s375
    $region4: #{tpu_custom_call.1} parent=1 // loop_header_branch
      %43 = sbr.rel (%p41) target = $region8
    $region5: #{tpu_custom_call.1} parent=1 // loop_body
      %s45 = ssub.s32 %s40, 1
      %s46 = ssub.s32 %s40, 2
      %s53 = sadd.s32 1, %s48
      %p54 = scmp.ge.s32.totalorder %s53, 4
      %s55 = scalar_select %p54, 0, %s53
      %s56 = sadd.s32 1, %s47
      %s57 = scalar_select %p54, %s56, %s47
      %p58 = scmp.ge.s32.totalorder %s57, 2
      %s59 = scalar_select %p58, 0, %s57
      %s60 = ssub.s32 %s47, %s59
      %p61 = scmp.eq.s32.totalorder %s60, 0
      %s63 = sadd.s32 %s62, 1
      %s64 = scalar_select %p61, %s62, %s63
      %p67 = pneg %p61
      %p68 = scmp.eq.s32.totalorder %s40, 7
      %p69 = por %p67, %p68
      %p70 = scmp.ne.s32.totalorder %s62, %s65
      %p71 = scmp.eq.s32.totalorder %s40, 0
      %p72 = por %p70, %p71
      %p73 = scmp.ne.s32.totalorder %s62, %s65
      %p74 = scmp.eq.s32.totalorder %s45, 7
      %p75 = por %p73, %p74
      %p76 = scmp.ne.s32.totalorder %s65, %s66
      %p77 = scmp.eq.s32.totalorder %s45, 0
      %p78 = por %p76, %p77
      %p79 = scmp.ne.s32.totalorder %s65, %s66
      %p80 = scmp.eq.s32.totalorder %s46, 7
      %p81 = por %p79, %p80
      %p83 = scmp.ne.s32.totalorder %s66, %s82
      %p84 = scmp.eq.s32.totalorder %s46, 0
      %p85 = por %p83, %p84
      %s86 = ssub.s32 %s47, %s59
      %p87 = scmp.eq.s32.totalorder %s86, 0
      %s89 = sadd.s32 %s88, 1
      %s90 = scalar_select %p87, %s88, %s89
      %p93 = pneg %p87
      %p94 = scmp.eq.s32.totalorder %s40, 7
      %p95 = por %p93, %p94
      %p96 = scmp.ne.s32.totalorder %s88, %s91
      %p97 = scmp.eq.s32.totalorder %s40, 0
      %p98 = por %p96, %p97
      %p99 = scmp.ne.s32.totalorder %s88, %s91
      %p100 = scmp.eq.s32.totalorder %s45, 7
      %p101 = por %p99, %p100
      %p102 = scmp.ne.s32.totalorder %s91, %s92
      %p103 = scmp.eq.s32.totalorder %s45, 0
      %p104 = por %p102, %p103
      %p105 = scmp.ne.s32.totalorder %s91, %s92
      %p106 = scmp.eq.s32.totalorder %s46, 7
      %p107 = por %p105, %p106
      %p109 = scmp.ne.s32.totalorder %s92, %s108
      %p110 = scmp.eq.s32.totalorder %s46, 0
      %p111 = por %p109, %p110
      %s112 = ssub.s32 %s47, %s59
      %p113 = scmp.eq.s32.totalorder %s112, 0
      %s115 = sadd.s32 %s114, 1
      %s116 = scalar_select %p113, %s114, %s115
      %p119 = pneg %p113
      %p120 = scmp.eq.s32.totalorder %s40, 7
      %p121 = por %p119, %p120
      %p122 = scmp.ne.s32.totalorder %s114, %s117
      %p123 = scmp.eq.s32.totalorder %s40, 0
      %p124 = por %p122, %p123
      %p125 = scmp.ne.s32.totalorder %s114, %s117
      %p126 = scmp.eq.s32.totalorder %s45, 7
      %p127 = por %p125, %p126
      %p128 = scmp.ne.s32.totalorder %s117, %s118
      %p129 = scmp.eq.s32.totalorder %s45, 0
      %p130 = por %p128, %p129
      %p131 = scmp.ne.s32.totalorder %s117, %s118
      %p132 = scmp.eq.s32.totalorder %s46, 7
      %p133 = por %p131, %p132
      %p135 = scmp.ne.s32.totalorder %s118, %s134
      %p136 = scmp.eq.s32.totalorder %s46, 0
      %p137 = por %p135, %p136
      %s138 = ssub.s32 %s48, %s55
      %p139 = scmp.eq.s32.totalorder %s138, 0
      %s141 = sadd.s32 %s140, 1
      %s142 = scalar_select %p139, %s140, %s141
      %p145 = pneg %p139
      %p146 = scmp.eq.s32.totalorder %s40, 7
      %p147 = por %p145, %p146
      %p148 = scmp.ne.s32.totalorder %s140, %s143
      %p149 = scmp.eq.s32.totalorder %s40, 0
      %p150 = por %p148, %p149
      %p151 = scmp.ne.s32.totalorder %s140, %s143
      %p152 = scmp.eq.s32.totalorder %s45, 7
      %p153 = por %p151, %p152
      %p154 = scmp.ne.s32.totalorder %s143, %s144
      %p155 = scmp.eq.s32.totalorder %s45, 0
      %p156 = por %p154, %p155
      %p157 = scmp.ne.s32.totalorder %s143, %s144
      %p158 = scmp.eq.s32.totalorder %s46, 7
      %p159 = por %p157, %p158
      %p161 = scmp.ne.s32.totalorder %s144, %s160
      %p162 = scmp.eq.s32.totalorder %s46, 0
      %p163 = por %p161, %p162
      %s164 = ssub.s32 %s48, %s55
      %p165 = scmp.eq.s32.totalorder %s164, 0
      %s167 = sadd.s32 %s166, 1
      %s168 = scalar_select %p165, %s166, %s167
      %p171 = pneg %p165
      %p172 = scmp.eq.s32.totalorder %s40, 7
      %p173 = por %p171, %p172
      %p174 = scmp.ne.s32.totalorder %s166, %s169
      %p175 = scmp.eq.s32.totalorder %s40, 0
      %p176 = por %p174, %p175
      %p177 = scmp.ne.s32.totalorder %s166, %s169
      %p178 = scmp.eq.s32.totalorder %s45, 7
      %p179 = por %p177, %p178
      %p180 = scmp.ne.s32.totalorder %s169, %s170
      %p181 = scmp.eq.s32.totalorder %s45, 0
      %p182 = por %p180, %p181
      %p183 = scmp.ne.s32.totalorder %s169, %s170
      %p184 = scmp.eq.s32.totalorder %s46, 7
      %p185 = por %p183, %p184
      %p187 = scmp.ne.s32.totalorder %s170, %s186
      %p188 = scmp.eq.s32.totalorder %s46, 0
      %p189 = por %p187, %p188
      %s190 = ssub.s32 %s48, %s55
      %p191 = scmp.eq.s32.totalorder %s190, 0
      %s193 = sadd.s32 %s192, 1
      %s194 = scalar_select %p191, %s192, %s193
      %p197 = pneg %p191
      %p198 = scmp.eq.s32.totalorder %s40, 7
      %p199 = por %p197, %p198
      %p200 = scmp.ne.s32.totalorder %s192, %s195
      %p201 = scmp.eq.s32.totalorder %s40, 0
      %p202 = por %p200, %p201
      %p203 = scmp.ne.s32.totalorder %s192, %s195
      %p204 = scmp.eq.s32.totalorder %s45, 7
      %p205 = por %p203, %p204
      %p206 = scmp.ne.s32.totalorder %s195, %s196
      %p207 = scmp.eq.s32.totalorder %s45, 0
      %p208 = por %p206, %p207
      %p209 = scmp.ne.s32.totalorder %s195, %s196
      %p210 = scmp.eq.s32.totalorder %s46, 7
      %p211 = por %p209, %p210
      %p213 = scmp.ne.s32.totalorder %s196, %s212
      %p214 = scmp.eq.s32.totalorder %s46, 0
      %p215 = por %p213, %p214
      %s216 = ssub.s32 %s48, %s55
      %p217 = scmp.eq.s32.totalorder %s216, 0
      %s219 = sadd.s32 %s218, 1
      %s220 = scalar_select %p217, %s218, %s219
      %p223 = pneg %p217
      %p224 = scmp.eq.s32.totalorder %s40, 7
      %p225 = por %p223, %p224
      %p226 = scmp.ne.s32.totalorder %s218, %s221
      %p227 = scmp.eq.s32.totalorder %s40, 0
      %p228 = por %p226, %p227
      %p229 = scmp.ne.s32.totalorder %s218, %s221
      %p230 = scmp.eq.s32.totalorder %s45, 7
      %p231 = por %p229, %p230
      %p232 = scmp.ne.s32.totalorder %s221, %s222
      %p233 = scmp.eq.s32.totalorder %s45, 0
      %p234 = por %p232, %p233
      %p235 = scmp.ne.s32.totalorder %s221, %s222
      %p236 = scmp.eq.s32.totalorder %s46, 7
      %p237 = por %p235, %p236
      %p239 = scmp.ne.s32.totalorder %s222, %s238
      %p240 = scmp.eq.s32.totalorder %s46, 0
      %p241 = por %p239, %p240
      %s242 = ssub.s32 %s48, %s55
      %p243 = scmp.eq.s32.totalorder %s242, 0
      %s245 = sadd.s32 %s244, 1
      %s246 = scalar_select %p243, %s244, %s245
      %p249 = pneg %p243
      %p250 = scmp.eq.s32.totalorder %s40, 7
      %p251 = por %p249, %p250
      %p252 = scmp.ne.s32.totalorder %s244, %s247
      %p253 = scmp.eq.s32.totalorder %s40, 0
      %p254 = por %p252, %p253
      %p255 = scmp.ne.s32.totalorder %s244, %s247
      %p256 = scmp.eq.s32.totalorder %s45, 7
      %p257 = por %p255, %p256
      %p258 = scmp.ne.s32.totalorder %s247, %s248
      %p259 = scmp.eq.s32.totalorder %s45, 0
      %p260 = por %p258, %p259
      %p261 = scmp.ne.s32.totalorder %s247, %s248
      %p262 = scmp.eq.s32.totalorder %s46, 7
      %p263 = por %p261, %p262
      %p265 = scmp.ne.s32.totalorder %s248, %s264
      %p266 = scmp.eq.s32.totalorder %s46, 0
      %p267 = por %p265, %p266
      %s268 = ssub.s32 %s48, %s55
      %p269 = scmp.eq.s32.totalorder %s268, 0
      %s271 = sadd.s32 %s270, 1
      %s272 = scalar_select %p269, %s270, %s271
      %p275 = pneg %p269
      %p276 = scmp.eq.s32.totalorder %s40, 7
      %p277 = por %p275, %p276
      %p278 = scmp.ne.s32.totalorder %s270, %s273
      %p279 = scmp.eq.s32.totalorder %s40, 0
      %p280 = por %p278, %p279
      %p281 = scmp.ne.s32.totalorder %s270, %s273
      %p282 = scmp.eq.s32.totalorder %s45, 7
      %p283 = por %p281, %p282
      %p284 = scmp.ne.s32.totalorder %s273, %s274
      %p285 = scmp.eq.s32.totalorder %s45, 0
      %p286 = por %p284, %p285
      %p287 = scmp.ne.s32.totalorder %s273, %s274
      %p288 = scmp.eq.s32.totalorder %s46, 7
      %p289 = por %p287, %p288
      %p291 = scmp.ne.s32.totalorder %s274, %s290
      %p292 = scmp.eq.s32.totalorder %s46, 0
      %p293 = por %p291, %p292
      %s294 = ssub.s32 %s48, %s55
      %p295 = scmp.eq.s32.totalorder %s294, 0
      %s297 = sadd.s32 %s296, 1
      %s298 = scalar_select %p295, %s296, %s297
      %p301 = pneg %p295
      %p302 = scmp.eq.s32.totalorder %s40, 7
      %p303 = por %p301, %p302
      %p304 = scmp.ne.s32.totalorder %s296, %s299
      %p305 = scmp.eq.s32.totalorder %s40, 0
      %p306 = por %p304, %p305
      %p307 = scmp.ne.s32.totalorder %s296, %s299
      %p308 = scmp.eq.s32.totalorder %s45, 7
      %p309 = por %p307, %p308
      %p310 = scmp.ne.s32.totalorder %s299, %s300
      %p311 = scmp.eq.s32.totalorder %s45, 0
      %p312 = por %p310, %p311
      %p313 = scmp.ne.s32.totalorder %s299, %s300
      %p314 = scmp.eq.s32.totalorder %s46, 7
      %p315 = por %p313, %p314
      %p317 = scmp.ne.s32.totalorder %s300, %s316
      %p318 = scmp.eq.s32.totalorder %s46, 0
      %p319 = por %p317, %p318
      %s321 = sadd.s32 %s320, 1
      %p324 = scmp.eq.s32.totalorder %s40, 7
      %p325 = scmp.ne.s32.totalorder %s320, %s322
      %p326 = scmp.eq.s32.totalorder %s40, 0
      %p327 = por %p325, %p326
      %p328 = scmp.ne.s32.totalorder %s320, %s322
      %p329 = scmp.eq.s32.totalorder %s45, 7
      %p330 = por %p328, %p329
      %p331 = scmp.ne.s32.totalorder %s322, %s323
      %p332 = scmp.eq.s32.totalorder %s45, 0
      %p333 = por %p331, %p332
      %p334 = scmp.ne.s32.totalorder %s322, %s323
      %p335 = scmp.eq.s32.totalorder %s46, 7
      %p336 = por %p334, %p335
      %p338 = scmp.ne.s32.totalorder %s323, %s337
      %p339 = scmp.eq.s32.totalorder %s46, 0
      %p340 = por %p338, %p339
      %s341 = ssub.s32 %s47, %s59
      %p342 = scmp.eq.s32.totalorder %s341, 0
      %s344 = sadd.s32 %s343, 1
      %s345 = scalar_select %p342, %s343, %s344
      %p348 = pneg %p342
      %p349 = scmp.eq.s32.totalorder %s40, 7
      %p350 = por %p348, %p349
      %p351 = scmp.ne.s32.totalorder %s343, %s346
      %p352 = scmp.eq.s32.totalorder %s40, 0
      %p353 = por %p351, %p352
      %p354 = scmp.ne.s32.totalorder %s343, %s346
      %p355 = scmp.eq.s32.totalorder %s45, 7
      %p356 = por %p354, %p355
      %p357 = scmp.ne.s32.totalorder %s346, %s347
      %p358 = scmp.eq.s32.totalorder %s45, 0
      %p359 = por %p357, %p358
      %p360 = scmp.ne.s32.totalorder %s346, %s347
      %p361 = scmp.eq.s32.totalorder %s46, 7
      %p362 = por %p360, %p361
      %p364 = scmp.ne.s32.totalorder %s347, %s363
      %p365 = scmp.eq.s32.totalorder %s46, 0
      %p366 = por %p364, %p365
      %s367 = ssub.s32 %s47, %s59
      %s368 = ssub.s32 %s48, %s55
      %s369 = sor.u32 %s367, %s368
      %p370 = scmp.eq.s32.totalorder %s369, 0
      %s372 = sadd.s32 %s371, 1
      %s373 = scalar_select %p370, %s371, %s372
      %p376 = pneg %p370
      %p377 = scmp.eq.s32.totalorder %s40, 7
      %p378 = por %p376, %p377
      %p379 = scmp.ne.s32.totalorder %s371, %s374
      %p380 = scmp.eq.s32.totalorder %s40, 0
      %p381 = por %p379, %p380
      %p382 = scmp.ne.s32.totalorder %s371, %s374
      %p383 = scmp.eq.s32.totalorder %s45, 7
      %p384 = por %p382, %p383
      %p385 = scmp.ne.s32.totalorder %s374, %s375
      %p386 = scmp.eq.s32.totalorder %s45, 0
      %p387 = por %p385, %p386
      %p388 = scmp.ne.s32.totalorder %s374, %s375
      %p389 = scmp.eq.s32.totalorder %s46, 7
      %p390 = por %p388, %p389
      %p392 = scmp.ne.s32.totalorder %s375, %s391
      %p393 = scmp.eq.s32.totalorder %s46, 0
      %p394 = por %p392, %p393
      %p395 = scmp.le.s32.totalorder 1, %s40
      %p396 = scmp.lt.s32.totalorder %s40, 9
      %p397 = pnand %p395, %p396
      %p398 = pneg %p397
      // Predicated region
      $region9: #{tpu_custom_call.1} parent=5 // pred_check
        _
      $region10: #{tpu_custom_call.1} parent=5 // pred_check_branch
        %400 = sbr.rel (%p397) target = $region12
      $region11: #{tpu_custom_call.1} parent=5 // pred_region
        %s401 = ssub.s32 %s40, 1
        // Predicated region
        $region13: #{tpu_custom_call.1} parent=11 // pred_check
          %p402 = pneg %p333
        $region14: #{tpu_custom_call.1} parent=11 // pred_check_branch
          %404 = sbr.rel (%p402) target = $region16
        $region15: #{tpu_custom_call.1} parent=11 // pred_region
          _
        $region16: #{tpu_custom_call.1} parent=11 // pred_fallthru
          _
      $region12: #{tpu_custom_call.1} parent=5 // pred_fallthru
        _
      %p405 = scmp.lt.s32.totalorder %s40, 8
      // Predicated region
      $region17: #{tpu_custom_call.1} parent=5 // pred_check
        %p406 = pneg %p405
      $region18: #{tpu_custom_call.1} parent=5 // pred_check_branch
        %408 = sbr.rel (%p406) target = $region20
      $region19: #{tpu_custom_call.1} parent=5 // pred_region
        // Predicated region
        $region21: #{tpu_custom_call.1} parent=19 // pred_check
          %p409 = pneg %p72
        $region22: #{tpu_custom_call.1} parent=19 // pred_check_branch
          %411 = sbr.rel (%p409) target = $region24
        $region23: #{tpu_custom_call.1} parent=19 // pred_region
          %s412 = sand.u32 %s62, 1
          %s413 = scalar_lea.sflag [#allocation4], %s412
          %s414 = sand.u32 %s62, 1
          %s415 = smul.addr %s414, 8
          %s416 = scalar_lea.vmem [#allocation3], %s415
          %s418 = ssub.s32 128, 128
          %419 = vsyncadd %s413, %s418
          %s420 = smul.addr %s47, 128
          %s421 = scalar_lea.hbm %s0, %s420
          %s423 = sshll.u32 %s416, 4
          %s424 = int_to_ptr.vmem [resolvable:$true] %s423
          %426 = dma.hbm_to_vmem [thread:$0]  %s421, 128, %s424, %s413
        $region24: #{tpu_custom_call.1} parent=19 // pred_fallthru
          _
        // Predicated region
        $region25: #{tpu_custom_call.1} parent=19 // pred_check
          %p427 = pneg %p98
        $region26: #{tpu_custom_call.1} parent=19 // pred_check_branch
          %429 = sbr.rel (%p427) target = $region28
        $region27: #{tpu_custom_call.1} parent=19 // pred_region
          %s430 = sand.u32 %s40, 1
          %s431 = scalar_lea.sflag [#allocation7], %s430
          %s432 = sand.u32 %s88, 1
          %s433 = smul.addr %s432, 8
          %s434 = scalar_lea.vmem [#allocation6], %s433
          %s436 = ssub.s32 128, 128
          %437 = vsyncadd %s431, %s436
          %s438 = smul.addr %s47, 128
          %s439 = scalar_lea.hbm %s1, %s438
          %s441 = sshll.u32 %s434, 4
          %s442 = int_to_ptr.vmem [resolvable:$true] %s441
          %444 = dma.hbm_to_vmem [thread:$0]  %s439, 128, %s442, %s431
        $region28: #{tpu_custom_call.1} parent=19 // pred_fallthru
          _
        // Predicated region
        $region29: #{tpu_custom_call.1} parent=19 // pred_check
          %p445 = pneg %p124
        $region30: #{tpu_custom_call.1} parent=19 // pred_check_branch
          %447 = sbr.rel (%p445) target = $region32
        $region31: #{tpu_custom_call.1} parent=19 // pred_region
          %s448 = sand.u32 %s40, 1
          %s449 = scalar_lea.sflag [#allocation7], %s448
          %s450 = sand.u32 %s114, 1
          %s451 = smul.addr %s450, 8
          %s452 = scalar_lea.vmem [#allocation8], %s451
          %s454 = ssub.s32 128, 128
          %455 = vsyncadd %s449, %s454
          %s456 = smul.addr %s47, 128
          %s457 = scalar_lea.hbm %s2, %s456
          %s459 = sshll.u32 %s452, 4
          %s460 = int_to_ptr.vmem [resolvable:$true] %s459
          %462 = dma.hbm_to_vmem [thread:$0]  %s457, 128, %s460, %s449
        $region32: #{tpu_custom_call.1} parent=19 // pred_fallthru
          _
        // Predicated region
        $region33: #{tpu_custom_call.1} parent=19 // pred_check
          %p463 = pneg %p150
        $region34: #{tpu_custom_call.1} parent=19 // pred_check_branch
          %465 = sbr.rel (%p463) target = $region36
        $region35: #{tpu_custom_call.1} parent=19 // pred_region
          %s466 = sand.u32 %s40, 1
          %s467 = scalar_lea.sflag [#allocation10], %s466
          %s468 = sand.u32 %s140, 1
          %s469 = smul.addr %s468, 8
          %s470 = scalar_lea.vmem [#allocation9], %s469
          %s472 = ssub.s32 128, 128
          %473 = vsyncadd %s467, %s472
          %s474 = smul.addr %s48, 128
          %s475 = scalar_lea.hbm %s3, %s474
          %s477 = sshll.u32 %s470, 4
          %s478 = int_to_ptr.vmem [resolvable:$true] %s477
          %480 = dma.hbm_to_vmem [thread:$0]  %s475, 128, %s478, %s467
        $region36: #{tpu_custom_call.1} parent=19 // pred_fallthru
          _
        // Predicated region
        $region37: #{tpu_custom_call.1} parent=19 // pred_check
          %p481 = pneg %p176
        $region38: #{tpu_custom_call.1} parent=19 // pred_check_branch
          %483 = sbr.rel (%p481) target = $region40
        $region39: #{tpu_custom_call.1} parent=19 // pred_region
          %s484 = sand.u32 %s40, 1
          %s485 = scalar_lea.sflag [#allocation10], %s484
          %s486 = sand.u32 %s166, 1
          %s487 = smul.addr %s486, 8
          %s488 = scalar_lea.vmem [#allocation11], %s487
          %s490 = ssub.s32 128, 128
          %491 = vsyncadd %s485, %s490
          %s492 = smul.addr %s48, 128
          %s493 = scalar_lea.hbm %s4, %s492
          %s495 = sshll.u32 %s488, 4
          %s496 = int_to_ptr.vmem [resolvable:$true] %s495
          %498 = dma.hbm_to_vmem [thread:$0]  %s493, 128, %s496, %s485
        $region40: #{tpu_custom_call.1} parent=19 // pred_fallthru
          _
        // Predicated region
        $region41: #{tpu_custom_call.1} parent=19 // pred_check
          %p499 = pneg %p202
        $region42: #{tpu_custom_call.1} parent=19 // pred_check_branch
          %501 = sbr.rel (%p499) target = $region44
        $region43: #{tpu_custom_call.1} parent=19 // pred_region
          %s502 = sand.u32 %s40, 1
          %s503 = scalar_lea.sflag [#allocation13], %s502
          %s504 = sand.u32 %s192, 1
          %s505 = smul.addr %s504, 8
          %s506 = scalar_lea.vmem [#allocation12], %s505
          %s508 = ssub.s32 128, 128
          %509 = vsyncadd %s503, %s508
          %s510 = smul.addr %s48, 128
          %s511 = scalar_lea.hbm %s5, %s510
          %s513 = sshll.u32 %s506, 4
          %s514 = int_to_ptr.vmem [resolvable:$true] %s513
          %516 = dma.hbm_to_vmem [thread:$0]  %s511, 128, %s514, %s503
        $region44: #{tpu_custom_call.1} parent=19 // pred_fallthru
          _
        // Predicated region
        $region45: #{tpu_custom_call.1} parent=19 // pred_check
          %p517 = pneg %p228
        $region46: #{tpu_custom_call.1} parent=19 // pred_check_branch
          %519 = sbr.rel (%p517) target = $region48
        $region47: #{tpu_custom_call.1} parent=19 // pred_region
          %s520 = sand.u32 %s40, 1
          %s521 = scalar_lea.sflag [#allocation13], %s520
          %s522 = sand.u32 %s218, 1
          %s523 = scalar_lea.vmem [#allocation14], %s522
          %s525 = ssub.s32 16, 16
          %526 = vsyncadd %s521, %s525
          %s527 = smul.addr %s48, 16
          %s528 = scalar_lea.hbm %s6, %s527
          %s530 = sshll.u32 %s523, 4
          %s531 = int_to_ptr.vmem [resolvable:$true] %s530
          %533 = dma.hbm_to_vmem [thread:$0]  %s528, 16, %s531, %s521
        $region48: #{tpu_custom_call.1} parent=19 // pred_fallthru
          _
        // Predicated region
        $region49: #{tpu_custom_call.1} parent=19 // pred_check
          %p534 = pneg %p254
        $region50: #{tpu_custom_call.1} parent=19 // pred_check_branch
          %536 = sbr.rel (%p534) target = $region52
        $region51: #{tpu_custom_call.1} parent=19 // pred_region
          %s537 = sand.u32 %s40, 1
          %s538 = scalar_lea.sflag [#allocation16], %s537
          %s539 = sand.u32 %s244, 1
          %s540 = scalar_lea.vmem [#allocation15], %s539
          %s542 = ssub.s32 16, 16
          %543 = vsyncadd %s538, %s542
          %s544 = smul.addr %s48, 16
          %s545 = scalar_lea.hbm %s7, %s544
          %s547 = sshll.u32 %s540, 4
          %s548 = int_to_ptr.vmem [resolvable:$true] %s547
          %550 = dma.hbm_to_vmem [thread:$0]  %s545, 16, %s548, %s538
        $region52: #{tpu_custom_call.1} parent=19 // pred_fallthru
          _
        // Predicated region
        $region53: #{tpu_custom_call.1} parent=19 // pred_check
          %p551 = pneg %p280
        $region54: #{tpu_custom_call.1} parent=19 // pred_check_branch
          %553 = sbr.rel (%p551) target = $region56
        $region55: #{tpu_custom_call.1} parent=19 // pred_region
          %s554 = sand.u32 %s40, 1
          %s555 = scalar_lea.sflag [#allocation16], %s554
          %s556 = sand.u32 %s270, 1
          %s557 = scalar_lea.vmem [#allocation17], %s556
          %s559 = ssub.s32 16, 16
          %560 = vsyncadd %s555, %s559
          %s561 = smul.addr %s48, 16
          %s562 = scalar_lea.hbm %s8, %s561
          %s564 = sshll.u32 %s557, 4
          %s565 = int_to_ptr.vmem [resolvable:$true] %s564
          %567 = dma.hbm_to_vmem [thread:$0]  %s562, 16, %s565, %s555
        $region56: #{tpu_custom_call.1} parent=19 // pred_fallthru
          _
        // Predicated region
        $region57: #{tpu_custom_call.1} parent=19 // pred_check
          %p568 = pneg %p306
        $region58: #{tpu_custom_call.1} parent=19 // pred_check_branch
          %570 = sbr.rel (%p568) target = $region60
        $region59: #{tpu_custom_call.1} parent=19 // pred_region
          %p571 = scmp.lt.s32.totalorder %s48, 3
          %s572 = scalar_select %p571, %s48, 3
          %s573 = smul.addr %s572, 8
          %s574 = scalar_lea.vmem %s9, %s573
        $region60: #{tpu_custom_call.1} parent=19 // pred_fallthru
          _
      $region20: #{tpu_custom_call.1} parent=5 // pred_fallthru
        _
      %p575 = scmp.le.s32.totalorder 1, %s40
      %p576 = scmp.lt.s32.totalorder %s40, 9
      %p577 = pnand %p575, %p576
      %p578 = pneg %p577
      // Predicated region
      $region61: #{tpu_custom_call.1} parent=5 // pred_check
        _
      $region62: #{tpu_custom_call.1} parent=5 // pred_check_branch
        %580 = sbr.rel (%p577) target = $region64
      $region63: #{tpu_custom_call.1} parent=5 // pred_region
        %s581 = ssub.s32 %s40, 1
        %s582 = sand.u32 %s65, 1
        %s583 = scalar_lea.sflag [#allocation4], %s582
        %s584 = sand.u32 %s65, 1
        %s585 = smul.addr %s584, 8
        %s586 = scalar_lea.vmem [#allocation3], %s585
        // Predicated region
        $region65: #{tpu_custom_call.1} parent=63 // pred_check
          %p587 = pneg %p78
        $region66: #{tpu_custom_call.1} parent=63 // pred_check_branch
          %589 = sbr.rel (%p587) target = $region68
        $region67: #{tpu_custom_call.1} parent=63 // pred_region
          %590 = dma.done %s583, 128
        $region68: #{tpu_custom_call.1} parent=63 // pred_fallthru
          _
        %s591 = sand.u32 %s45, 1
        %s592 = scalar_lea.sflag [#allocation7], %s591
        %s593 = sand.u32 %s91, 1
        %s594 = smul.addr %s593, 8
        %s595 = scalar_lea.vmem [#allocation6], %s594
        // Predicated region
        $region69: #{tpu_custom_call.1} parent=63 // pred_check
          %p596 = pneg %p104
        $region70: #{tpu_custom_call.1} parent=63 // pred_check_branch
          %598 = sbr.rel (%p596) target = $region72
        $region71: #{tpu_custom_call.1} parent=63 // pred_region
          %599 = dma.done %s592, 128
        $region72: #{tpu_custom_call.1} parent=63 // pred_fallthru
          _
        %s600 = sand.u32 %s45, 1
        %s601 = scalar_lea.sflag [#allocation7], %s600
        %s602 = sand.u32 %s117, 1
        %s603 = smul.addr %s602, 8
        %s604 = scalar_lea.vmem [#allocation8], %s603
        // Predicated region
        $region73: #{tpu_custom_call.1} parent=63 // pred_check
          %p605 = pneg %p130
        $region74: #{tpu_custom_call.1} parent=63 // pred_check_branch
          %607 = sbr.rel (%p605) target = $region76
        $region75: #{tpu_custom_call.1} parent=63 // pred_region
          %608 = dma.done %s601, 128
        $region76: #{tpu_custom_call.1} parent=63 // pred_fallthru
          _
        %s609 = sand.u32 %s45, 1
        %s610 = scalar_lea.sflag [#allocation10], %s609
        %s611 = sand.u32 %s143, 1
        %s612 = smul.addr %s611, 8
        %s613 = scalar_lea.vmem [#allocation9], %s612
        // Predicated region
        $region77: #{tpu_custom_call.1} parent=63 // pred_check
          %p614 = pneg %p156
        $region78: #{tpu_custom_call.1} parent=63 // pred_check_branch
          %616 = sbr.rel (%p614) target = $region80
        $region79: #{tpu_custom_call.1} parent=63 // pred_region
          %617 = dma.done %s610, 128
        $region80: #{tpu_custom_call.1} parent=63 // pred_fallthru
          _
        %s618 = sand.u32 %s45, 1
        %s619 = scalar_lea.sflag [#allocation10], %s618
        %s620 = sand.u32 %s169, 1
        %s621 = smul.addr %s620, 8
        %s622 = scalar_lea.vmem [#allocation11], %s621
        // Predicated region
        $region81: #{tpu_custom_call.1} parent=63 // pred_check
          %p623 = pneg %p182
        $region82: #{tpu_custom_call.1} parent=63 // pred_check_branch
          %625 = sbr.rel (%p623) target = $region84
        $region83: #{tpu_custom_call.1} parent=63 // pred_region
          %626 = dma.done %s619, 128
        $region84: #{tpu_custom_call.1} parent=63 // pred_fallthru
          _
        %s627 = sand.u32 %s45, 1
        %s628 = scalar_lea.sflag [#allocation13], %s627
        %s629 = sand.u32 %s195, 1
        %s630 = smul.addr %s629, 8
        %s631 = scalar_lea.vmem [#allocation12], %s630
        // Predicated region
        $region85: #{tpu_custom_call.1} parent=63 // pred_check
          %p632 = pneg %p208
        $region86: #{tpu_custom_call.1} parent=63 // pred_check_branch
          %634 = sbr.rel (%p632) target = $region88
        $region87: #{tpu_custom_call.1} parent=63 // pred_region
          %635 = dma.done %s628, 128
        $region88: #{tpu_custom_call.1} parent=63 // pred_fallthru
          _
        %s636 = sand.u32 %s45, 1
        %s637 = scalar_lea.sflag [#allocation13], %s636
        %s638 = sand.u32 %s221, 1
        %s639 = scalar_lea.vmem [#allocation14], %s638
        // Predicated region
        $region89: #{tpu_custom_call.1} parent=63 // pred_check
          %p640 = pneg %p234
        $region90: #{tpu_custom_call.1} parent=63 // pred_check_branch
          %642 = sbr.rel (%p640) target = $region92
        $region91: #{tpu_custom_call.1} parent=63 // pred_region
          %643 = dma.done %s637, 16
        $region92: #{tpu_custom_call.1} parent=63 // pred_fallthru
          _
        %s644 = sand.u32 %s45, 1
        %s645 = scalar_lea.sflag [#allocation16], %s644
        %s646 = sand.u32 %s247, 1
        %s647 = scalar_lea.vmem [#allocation15], %s646
        // Predicated region
        $region93: #{tpu_custom_call.1} parent=63 // pred_check
          %p648 = pneg %p260
        $region94: #{tpu_custom_call.1} parent=63 // pred_check_branch
          %650 = sbr.rel (%p648) target = $region96
        $region95: #{tpu_custom_call.1} parent=63 // pred_region
          %651 = dma.done %s645, 16
        $region96: #{tpu_custom_call.1} parent=63 // pred_fallthru
          _
        %s652 = sand.u32 %s45, 1
        %s653 = scalar_lea.sflag [#allocation16], %s652
        %s654 = sand.u32 %s273, 1
        %s655 = scalar_lea.vmem [#allocation17], %s654
        // Predicated region
        $region97: #{tpu_custom_call.1} parent=63 // pred_check
          %p656 = pneg %p286
        $region98: #{tpu_custom_call.1} parent=63 // pred_check_branch
          %658 = sbr.rel (%p656) target = $region100
        $region99: #{tpu_custom_call.1} parent=63 // pred_region
          %659 = dma.done %s653, 16
        $region100: #{tpu_custom_call.1} parent=63 // pred_fallthru
          _
        %s660 = sand.u32 %s65, 1
        %s661 = scalar_lea.sflag [#allocation4], %s660
        %s662 = sand.u32 %s65, 1
        %s663 = smul.addr %s662, 8
        %s664 = scalar_lea.vmem [#allocation3], %s663
        %p665 = pneg %p78
        %p666 = pneg %p75
        %s667 = sand.u32 %s45, 1
        %s668 = scalar_lea.sflag [#allocation7], %s667
        %s669 = sand.u32 %s91, 1
        %s670 = smul.addr %s669, 8
        %s671 = scalar_lea.vmem [#allocation6], %s670
        %p672 = pneg %p104
        %p673 = pneg %p101
        %s674 = sand.u32 %s45, 1
        %s675 = scalar_lea.sflag [#allocation7], %s674
        %s676 = sand.u32 %s117, 1
        %s677 = smul.addr %s676, 8
        %s678 = scalar_lea.vmem [#allocation8], %s677
        %p679 = pneg %p130
        %p680 = pneg %p127
        %s681 = sand.u32 %s45, 1
        %s682 = scalar_lea.sflag [#allocation10], %s681
        %s683 = sand.u32 %s143, 1
        %s684 = smul.addr %s683, 8
        %s685 = scalar_lea.vmem [#allocation9], %s684
        %p686 = pneg %p156
        %p687 = pneg %p153
        %s688 = sand.u32 %s45, 1
        %s689 = scalar_lea.sflag [#allocation10], %s688
        %s690 = sand.u32 %s169, 1
        %s691 = smul.addr %s690, 8
        %s692 = scalar_lea.vmem [#allocation11], %s691
        %p693 = pneg %p182
        %p694 = pneg %p179
        %s695 = sand.u32 %s45, 1
        %s696 = scalar_lea.sflag [#allocation13], %s695
        %s697 = sand.u32 %s195, 1
        %s698 = smul.addr %s697, 8
        %s699 = scalar_lea.vmem [#allocation12], %s698
        %p700 = pneg %p208
        %p701 = pneg %p205
        %s702 = sand.u32 %s45, 1
        %s703 = scalar_lea.sflag [#allocation13], %s702
        %s704 = sand.u32 %s221, 1
        %s705 = scalar_lea.vmem [#allocation14], %s704
        %p706 = pneg %p234
        %p707 = pneg %p231
        %s708 = sand.u32 %s45, 1
        %s709 = scalar_lea.sflag [#allocation16], %s708
        %s710 = sand.u32 %s247, 1
        %s711 = scalar_lea.vmem [#allocation15], %s710
        %p712 = pneg %p260
        %p713 = pneg %p257
        %s714 = sand.u32 %s45, 1
        %s715 = scalar_lea.sflag [#allocation16], %s714
        %s716 = sand.u32 %s273, 1
        %s717 = scalar_lea.vmem [#allocation17], %s716
        %p718 = pneg %p286
        %p719 = pneg %p283
        %p720 = scmp.lt.s32.totalorder %s50, 3
        %s721 = scalar_select %p720, %s50, 3
        %s722 = smul.addr %s721, 8
        %s723 = scalar_lea.vmem %s9, %s722
        %p724 = pneg %p312
        %p725 = pneg %p309
        %p726 = pneg %p333
        %p727 = pneg %p330
        %p728 = pneg %p359
        %p729 = pneg %p356
        %s730 = sand.u32 %s346, 1
        %s731 = scalar_lea.sflag [#allocation5], %s730
        %s732 = sand.u32 %s346, 1
        %s733 = smul.addr %s732, 8
        %s734 = scalar_lea.vmem [#allocation18], %s733
        %p735 = pneg %p387
        %p736 = pneg %p384
        %s737 = sand.u32 %s374, 1
        %s738 = scalar_lea.sflag [#allocation20], %s737
        %s739 = sand.u32 %s374, 1
        %s740 = smul.addr %s739, 8
        %s741 = scalar_lea.vmem [#allocation19], %s740
        %p742 = scmp.lt.s32.totalorder %s50, 3
        %s743 = scalar_select %p742, %s50, 3
        %s744 = smul.addr %s743, 8
        %s745 = scalar_lea.vmem %s9, %s744
        %p746 = scmp.eq.s32.totalorder %s50, 0
        // Predicated region
        $region101: #{tpu_custom_call.1} parent=63 // pred_check
          %p747 = pneg %p746
        $region102: #{tpu_custom_call.1} parent=63 // pred_check_branch
          %749 = sbr.rel (%p747) target = $region104
        $region103: #{tpu_custom_call.1} parent=63 // pred_region
          %vm750 = vcmask 261120
          %751 = vst.msk [vmem:[#allocation2] sm:$0xff] %vm750, 0.0
        $region104: #{tpu_custom_call.1} parent=63 // pred_fallthru
          _
        %v752 = vld [vmem:[%s586] sm:$0xff]
        %v753 = vld [vmem:[%s613] sm:$0xff]
        %v754 = vld [vmem:[%s639] sm:$0x1]
        %v756 = vlaneseq
        %v757 = vshrl.u32 %v756, 7
        %v758 = vsub.s32 0, %v757
        %v759 = vrot.slane %v754, %v758
        %vm761 = vcmask 261120
        %v763 = vsel %vm761, %v752, 0
        %v766 = vsel %vm761, %v753, 0
        %768 = vmatprep.subr.mxu0 0.0
        %769 = vmatpush1.xpose.msra.mxu0 %v766
        %770 = vmatprep.subr.mxu0 0.0
        %771 = vmatpush1.xpose.msra.mxu0 0.0
        %772 = vmatprep.subr.mxu0 0.0
        %773 = vmatpush1.xpose.msra.mxu0 0.0
        %774 = vmatprep.subr.mxu0 0.0
        %775 = vmatpush1.xpose.msra.mxu0 0.0
        %776 = vmatprep.subr.mxu0 0.0
        %777 = vmatpush1.xpose.msra.mxu0 0.0
        %778 = vmatprep.subr.mxu0 0.0
        %779 = vmatpush1.xpose.msra.mxu0 0.0
        %780 = vmatprep.subr.mxu0 0.0
        %781 = vmatpush1.xpose.msra.mxu0 0.0
        %782 = vmatprep.subr.mxu0 0.0
        %783 = vmatpush1.xpose.msra.mxu0 0.0
        %784 = vmatprep.subr.mxu0 0.0
        %785 = vmatpush1.xpose.msra.mxu0 0.0
        %786 = vmatprep.subr.mxu0 0.0
        %787 = vmatpush1.xpose.msra.mxu0 0.0
        %788 = vmatprep.subr.mxu0 0.0
        %789 = vmatpush1.xpose.msra.mxu0 0.0
        %790 = vmatprep.subr.mxu0 0.0
        %791 = vmatpush1.xpose.msra.mxu0 0.0
        %792 = vmatprep.subr.mxu0 0.0
        %793 = vmatpush1.xpose.msra.mxu0 0.0
        %794 = vmatprep.subr.mxu0 0.0
        %795 = vmatpush1.xpose.msra.mxu0 0.0
        %796 = vmatprep.subr.mxu0 0.0
        %797 = vmatpush1.xpose.msra.mxu0 0.0
        %798 = vmatprep.subr.mxu0 0.0
        %799 = vmatpush1.xpose.msra.mxu0 0.0
        %800 = vmatprep.subr.mxu0 0.0
        %801 = vmatpush1.xpose.msra.mxu0 0.0
        %802 = vmatprep.subr.mxu0 0.0
        %803 = vmatpush1.xpose.msra.mxu0 0.0
        %804 = vmatprep.subr.mxu0 0.0
        %805 = vmatpush1.xpose.msra.mxu0 0.0
        %806 = vmatprep.subr.mxu0 0.0
        %807 = vmatpush1.xpose.msra.mxu0 0.0
        %808 = vmatprep.subr.mxu0 0.0
        %809 = vmatpush1.xpose.msra.mxu0 0.0
        %810 = vmatprep.subr.mxu0 0.0
        %811 = vmatpush1.xpose.msra.mxu0 0.0
        %812 = vmatprep.subr.mxu0 0.0
        %813 = vmatpush1.xpose.msra.mxu0 0.0
        %814 = vmatprep.subr.mxu0 0.0
        %815 = vmatpush1.xpose.msra.mxu0 0.0
        %816 = vmatprep.subr.mxu0 0.0
        %817 = vmatpush1.xpose.msra.mxu0 0.0
        %818 = vmatprep.subr.mxu0 0.0
        %819 = vmatpush1.xpose.msra.mxu0 0.0
        %820 = vmatprep.subr.mxu0 0.0
        %821 = vmatpush1.xpose.msra.mxu0 0.0
        %822 = vmatprep.subr.mxu0 0.0
        %823 = vmatpush1.xpose.msra.mxu0 0.0
        %824 = vmatprep.subr.mxu0 0.0
        %825 = vmatpush1.xpose.msra.mxu0 0.0
        %826 = vmatprep.subr.mxu0 0.0
        %827 = vmatpush1.xpose.msra.mxu0 0.0
        %828 = vmatprep.subr.mxu0 0.0
        %829 = vmatpush1.xpose.msra.mxu0 0.0
        %830 = vmatprep.subr.mxu0 0.0
        %831 = vmatpush1.xpose.msra.mxu0 0.0
        %832 = vmatprep.mubr.f32.mxu0 0.0
        %833 = vmatmul.mubr.f32.gmra.mrb[0].mxu0 %v763
        %v834 = vpop.f32.mrb[0].mxu0
        %v835 = vadd.f32 %v759, %v834
        %v836 = vpop.f32.mrb[0].mxu0
        %837 = vdwg.mxu0
        %v838 = vld [vmem:[%s595] sm:$0xff]
        %v839 = vld [vmem:[%s622] sm:$0xff]
        %v840 = vld [vmem:[%s647] sm:$0x1]
        %v842 = vlaneseq
        %v843 = vshrl.u32 %v842, 7
        %v844 = vsub.s32 0, %v843
        %v845 = vrot.slane %v840, %v844
        %v848 = vsel %vm761, %v838, 0
        %v851 = vsel %vm761, %v839, 0
        %853 = vmatprep.subr.mxu0 0.0
        %854 = vmatpush1.xpose.msra.mxu0 %v851
        %855 = vmatprep.subr.mxu0 0.0
        %856 = vmatpush1.xpose.msra.mxu0 0.0
        %857 = vmatprep.subr.mxu0 0.0
        %858 = vmatpush1.xpose.msra.mxu0 0.0
        %859 = vmatprep.subr.mxu0 0.0
        %860 = vmatpush1.xpose.msra.mxu0 0.0
        %861 = vmatprep.subr.mxu0 0.0
        %862 = vmatpush1.xpose.msra.mxu0 0.0
        %863 = vmatprep.subr.mxu0 0.0
        %864 = vmatpush1.xpose.msra.mxu0 0.0
        %865 = vmatprep.subr.mxu0 0.0
        %866 = vmatpush1.xpose.msra.mxu0 0.0
        %867 = vmatprep.subr.mxu0 0.0
        %868 = vmatpush1.xpose.msra.mxu0 0.0
        %869 = vmatprep.subr.mxu0 0.0
        %870 = vmatpush1.xpose.msra.mxu0 0.0
        %871 = vmatprep.subr.mxu0 0.0
        %872 = vmatpush1.xpose.msra.mxu0 0.0
        %873 = vmatprep.subr.mxu0 0.0
        %874 = vmatpush1.xpose.msra.mxu0 0.0
        %875 = vmatprep.subr.mxu0 0.0
        %876 = vmatpush1.xpose.msra.mxu0 0.0
        %877 = vmatprep.subr.mxu0 0.0
        %878 = vmatpush1.xpose.msra.mxu0 0.0
        %879 = vmatprep.subr.mxu0 0.0
        %880 = vmatpush1.xpose.msra.mxu0 0.0
        %881 = vmatprep.subr.mxu0 0.0
        %882 = vmatpush1.xpose.msra.mxu0 0.0
        %883 = vmatprep.subr.mxu0 0.0
        %884 = vmatpush1.xpose.msra.mxu0 0.0
        %885 = vmatprep.subr.mxu0 0.0
        %886 = vmatpush1.xpose.msra.mxu0 0.0
        %887 = vmatprep.subr.mxu0 0.0
        %888 = vmatpush1.xpose.msra.mxu0 0.0
        %889 = vmatprep.subr.mxu0 0.0
        %890 = vmatpush1.xpose.msra.mxu0 0.0
        %891 = vmatprep.subr.mxu0 0.0
        %892 = vmatpush1.xpose.msra.mxu0 0.0
        %893 = vmatprep.subr.mxu0 0.0
        %894 = vmatpush1.xpose.msra.mxu0 0.0
        %895 = vmatprep.subr.mxu0 0.0
        %896 = vmatpush1.xpose.msra.mxu0 0.0
        %897 = vmatprep.subr.mxu0 0.0
        %898 = vmatpush1.xpose.msra.mxu0 0.0
        %899 = vmatprep.subr.mxu0 0.0
        %900 = vmatpush1.xpose.msra.mxu0 0.0
        %901 = vmatprep.subr.mxu0 0.0
        %902 = vmatpush1.xpose.msra.mxu0 0.0
        %903 = vmatprep.subr.mxu0 0.0
        %904 = vmatpush1.xpose.msra.mxu0 0.0
        %905 = vmatprep.subr.mxu0 0.0
        %906 = vmatpush1.xpose.msra.mxu0 0.0
        %907 = vmatprep.subr.mxu0 0.0
        %908 = vmatpush1.xpose.msra.mxu0 0.0
        %909 = vmatprep.subr.mxu0 0.0
        %910 = vmatpush1.xpose.msra.mxu0 0.0
        %911 = vmatprep.subr.mxu0 0.0
        %912 = vmatpush1.xpose.msra.mxu0 0.0
        %913 = vmatprep.subr.mxu0 0.0
        %914 = vmatpush1.xpose.msra.mxu0 0.0
        %915 = vmatprep.subr.mxu0 0.0
        %916 = vmatpush1.xpose.msra.mxu0 0.0
        %917 = vmatprep.mubr.f32.mxu0 0.0
        %918 = vmatmul.mubr.f32.gmra.mrb[0].mxu0 %v848
        %v919 = vpop.f32.mrb[0].mxu0
        %v920 = vadd.f32 %v845, %v919
        %v921 = vpop.f32.mrb[0].mxu0
        %922 = vdwg.mxu0
        %v923 = vld [vmem:[%s604] sm:$0xff]
        %v924 = vld [vmem:[%s631] sm:$0xff]
        %v925 = vld [vmem:[%s655] sm:$0x1]
        %v927 = vlaneseq
        %v928 = vshrl.u32 %v927, 7
        %v929 = vsub.s32 0, %v928
        %v930 = vrot.slane %v925, %v929
        %v933 = vsel %vm761, %v923, 0
        %v936 = vsel %vm761, %v924, 0
        %938 = vmatprep.subr.mxu0 0.0
        %939 = vmatpush1.xpose.msra.mxu0 %v936
        %940 = vmatprep.subr.mxu0 0.0
        %941 = vmatpush1.xpose.msra.mxu0 0.0
        %942 = vmatprep.subr.mxu0 0.0
        %943 = vmatpush1.xpose.msra.mxu0 0.0
        %944 = vmatprep.subr.mxu0 0.0
        %945 = vmatpush1.xpose.msra.mxu0 0.0
        %946 = vmatprep.subr.mxu0 0.0
        %947 = vmatpush1.xpose.msra.mxu0 0.0
        %948 = vmatprep.subr.mxu0 0.0
        %949 = vmatpush1.xpose.msra.mxu0 0.0
        %950 = vmatprep.subr.mxu0 0.0
        %951 = vmatpush1.xpose.msra.mxu0 0.0
        %952 = vmatprep.subr.mxu0 0.0
        %953 = vmatpush1.xpose.msra.mxu0 0.0
        %954 = vmatprep.subr.mxu0 0.0
        %955 = vmatpush1.xpose.msra.mxu0 0.0
        %956 = vmatprep.subr.mxu0 0.0
        %957 = vmatpush1.xpose.msra.mxu0 0.0
        %958 = vmatprep.subr.mxu0 0.0
        %959 = vmatpush1.xpose.msra.mxu0 0.0
        %960 = vmatprep.subr.mxu0 0.0
        %961 = vmatpush1.xpose.msra.mxu0 0.0
        %962 = vmatprep.subr.mxu0 0.0
        %963 = vmatpush1.xpose.msra.mxu0 0.0
        %964 = vmatprep.subr.mxu0 0.0
        %965 = vmatpush1.xpose.msra.mxu0 0.0
        %966 = vmatprep.subr.mxu0 0.0
        %967 = vmatpush1.xpose.msra.mxu0 0.0
        %968 = vmatprep.subr.mxu0 0.0
        %969 = vmatpush1.xpose.msra.mxu0 0.0
        %970 = vmatprep.subr.mxu0 0.0
        %971 = vmatpush1.xpose.msra.mxu0 0.0
        %972 = vmatprep.subr.mxu0 0.0
        %973 = vmatpush1.xpose.msra.mxu0 0.0
        %974 = vmatprep.subr.mxu0 0.0
        %975 = vmatpush1.xpose.msra.mxu0 0.0
        %976 = vmatprep.subr.mxu0 0.0
        %977 = vmatpush1.xpose.msra.mxu0 0.0
        %978 = vmatprep.subr.mxu0 0.0
        %979 = vmatpush1.xpose.msra.mxu0 0.0
        %980 = vmatprep.subr.mxu0 0.0
        %981 = vmatpush1.xpose.msra.mxu0 0.0
        %982 = vmatprep.subr.mxu0 0.0
        %983 = vmatpush1.xpose.msra.mxu0 0.0
        %984 = vmatprep.subr.mxu0 0.0
        %985 = vmatpush1.xpose.msra.mxu0 0.0
        %986 = vmatprep.subr.mxu0 0.0
        %987 = vmatpush1.xpose.msra.mxu0 0.0
        %988 = vmatprep.subr.mxu0 0.0
        %989 = vmatpush1.xpose.msra.mxu0 0.0
        %990 = vmatprep.subr.mxu0 0.0
        %991 = vmatpush1.xpose.msra.mxu0 0.0
        %992 = vmatprep.subr.mxu0 0.0
        %993 = vmatpush1.xpose.msra.mxu0 0.0
        %994 = vmatprep.subr.mxu0 0.0
        %995 = vmatpush1.xpose.msra.mxu0 0.0
        %996 = vmatprep.subr.mxu0 0.0
        %997 = vmatpush1.xpose.msra.mxu0 0.0
        %998 = vmatprep.subr.mxu0 0.0
        %999 = vmatpush1.xpose.msra.mxu0 0.0
        %1000 = vmatprep.subr.mxu0 0.0
        %1001 = vmatpush1.xpose.msra.mxu0 0.0
        %1002 = vmatprep.mubr.f32.mxu0 0.0
        %1003 = vmatmul.mubr.f32.gmra.mrb[0].mxu0 %v933
        %v1004 = vpop.f32.mrb[0].mxu0
        %v1005 = vadd.f32 %v930, %v1004
        %v1006 = vpop.f32.mrb[0].mxu0
        %1007 = vdwg.mxu0
        %vm1008 = vcmask 64512
        %v1010 = vsel %vm1008, %v835, 0
        %v1013 = vsel %vm1008, %v920, 0
        %1015 = vmatprep.subr.mxu0 0.0
        %1016 = vmatpush1.xpose.msra.mxu0 %v1013
        %1017 = vmatprep.subr.mxu0 0.0
        %1018 = vmatpush1.xpose.msra.mxu0 0.0
        %1019 = vmatprep.subr.mxu0 0.0
        %1020 = vmatpush1.xpose.msra.mxu0 0.0
        %1021 = vmatprep.subr.mxu0 0.0
        %1022 = vmatpush1.xpose.msra.mxu0 0.0
        %1023 = vmatprep.subr.mxu0 0.0
        %1024 = vmatpush1.xpose.msra.mxu0 0.0
        %1025 = vmatprep.subr.mxu0 0.0
        %1026 = vmatpush1.xpose.msra.mxu0 0.0
        %1027 = vmatprep.subr.mxu0 0.0
        %1028 = vmatpush1.xpose.msra.mxu0 0.0
        %1029 = vmatprep.subr.mxu0 0.0
        %1030 = vmatpush1.xpose.msra.mxu0 0.0
        %1031 = vmatprep.subr.mxu0 0.0
        %1032 = vmatpush1.xpose.msra.mxu0 0.0
        %1033 = vmatprep.subr.mxu0 0.0
        %1034 = vmatpush1.xpose.msra.mxu0 0.0
        %1035 = vmatprep.subr.mxu0 0.0
        %1036 = vmatpush1.xpose.msra.mxu0 0.0
        %1037 = vmatprep.subr.mxu0 0.0
        %1038 = vmatpush1.xpose.msra.mxu0 0.0
        %1039 = vmatprep.subr.mxu0 0.0
        %1040 = vmatpush1.xpose.msra.mxu0 0.0
        %1041 = vmatprep.subr.mxu0 0.0
        %1042 = vmatpush1.xpose.msra.mxu0 0.0
        %1043 = vmatprep.subr.mxu0 0.0
        %1044 = vmatpush1.xpose.msra.mxu0 0.0
        %1045 = vmatprep.subr.mxu0 0.0
        %1046 = vmatpush1.xpose.msra.mxu0 0.0
        %1047 = vmatprep.subr.mxu0 0.0
        %1048 = vmatpush1.xpose.msra.mxu0 0.0
        %1049 = vmatprep.subr.mxu0 0.0
        %1050 = vmatpush1.xpose.msra.mxu0 0.0
        %1051 = vmatprep.subr.mxu0 0.0
        %1052 = vmatpush1.xpose.msra.mxu0 0.0
        %1053 = vmatprep.subr.mxu0 0.0
        %1054 = vmatpush1.xpose.msra.mxu0 0.0
        %1055 = vmatprep.subr.mxu0 0.0
        %1056 = vmatpush1.xpose.msra.mxu0 0.0
        %1057 = vmatprep.subr.mxu0 0.0
        %1058 = vmatpush1.xpose.msra.mxu0 0.0
        %1059 = vmatprep.subr.mxu0 0.0
        %1060 = vmatpush1.xpose.msra.mxu0 0.0
        %1061 = vmatprep.subr.mxu0 0.0
        %1062 = vmatpush1.xpose.msra.mxu0 0.0
        %1063 = vmatprep.subr.mxu0 0.0
        %1064 = vmatpush1.xpose.msra.mxu0 0.0
        %1065 = vmatprep.subr.mxu0 0.0
        %1066 = vmatpush1.xpose.msra.mxu0 0.0
        %1067 = vmatprep.subr.mxu0 0.0
        %1068 = vmatpush1.xpose.msra.mxu0 0.0
        %1069 = vmatprep.subr.mxu0 0.0
        %1070 = vmatpush1.xpose.msra.mxu0 0.0
        %1071 = vmatprep.subr.mxu0 0.0
        %1072 = vmatpush1.xpose.msra.mxu0 0.0
        %1073 = vmatprep.subr.mxu0 0.0
        %1074 = vmatpush1.xpose.msra.mxu0 0.0
        %1075 = vmatprep.subr.mxu0 0.0
        %1076 = vmatpush1.xpose.msra.mxu0 0.0
        %1077 = vmatprep.subr.mxu0 0.0
        %1078 = vmatpush1.xpose.msra.mxu0 0.0
        %1079 = vmatprep.mubr.f32.mxu0 0.0
        %1080 = vmatmul.mubr.f32.gmra.mrb[0].mxu0 %v1010
        %v1081 = vpop.f32.mrb[0].mxu0
        %v1082 = vadd.f32 0.0, %v1081
        %v1083 = vpop.f32.mrb[0].mxu0
        %1084 = vdwg.mxu0
        %v1085 = vmul.f32 %v1082, 0.35355338
        %vm1086 = vcmp.eq.f32.partialorder %v1085, 0.0
        %v1087 = vsel %vm1086, -inf, %v1085
        %v1088 = vsel %vm1008, %v1087, -inf
        %1089 = vmax.xlane.f32.xlu0 %v1088
        %v1090 = vpop.xlane.xlu0 %1089
        %v1091 = vsub.f32 %v1087, %v1090
        %v1092 = vmul.f32 %v1091, 1.442695
        %v1093 = vpow.pop %v1092
        %v1094 = vsel %vm1008, %v1093, 0.0
        %1095 = vadd.xlane.f32.xlu0 %v1094
        %v1096 = vpop.xlane.xlu0 %1095
        %v1097 = vrcp.pop %v1096
        %v1098 = vmul.f32 %v1093, %v1097
        %1099 = vst.msk [vmem:[%s741] sm:$0xff] %vm1008, %v1098
        %v1101 = vsel %vm1008, %v1098, 0
        %1103 = vmatprep.subr.mxu0 0.0
        %1104 = vmatpush1.msra.mxu0 %v1005
        %1105 = vmatprep.subr.mxu0 0.0
        %1106 = vmatpush1.msra.mxu0 0.0
        %1107 = vmatprep.subr.mxu0 0.0
        %1108 = vmatpush1.msra.mxu0 0.0
        %1109 = vmatprep.subr.mxu0 0.0
        %1110 = vmatpush1.msra.mxu0 0.0
        %1111 = vmatprep.subr.mxu0 0.0
        %1112 = vmatpush1.msra.mxu0 0.0
        %1113 = vmatprep.subr.mxu0 0.0
        %1114 = vmatpush1.msra.mxu0 0.0
        %1115 = vmatprep.subr.mxu0 0.0
        %1116 = vmatpush1.msra.mxu0 0.0
        %1117 = vmatprep.subr.mxu0 0.0
        %1118 = vmatpush1.msra.mxu0 0.0
        %1119 = vmatprep.subr.mxu0 0.0
        %1120 = vmatpush1.msra.mxu0 0.0
        %1121 = vmatprep.subr.mxu0 0.0
        %1122 = vmatpush1.msra.mxu0 0.0
        %1123 = vmatprep.subr.mxu0 0.0
        %1124 = vmatpush1.msra.mxu0 0.0
        %1125 = vmatprep.subr.mxu0 0.0
        %1126 = vmatpush1.msra.mxu0 0.0
        %1127 = vmatprep.subr.mxu0 0.0
        %1128 = vmatpush1.msra.mxu0 0.0
        %1129 = vmatprep.subr.mxu0 0.0
        %1130 = vmatpush1.msra.mxu0 0.0
        %1131 = vmatprep.subr.mxu0 0.0
        %1132 = vmatpush1.msra.mxu0 0.0
        %1133 = vmatprep.subr.mxu0 0.0
        %1134 = vmatpush1.msra.mxu0 0.0
        %1135 = vmatprep.subr.mxu0 0.0
        %1136 = vmatpush1.msra.mxu0 0.0
        %1137 = vmatprep.subr.mxu0 0.0
        %1138 = vmatpush1.msra.mxu0 0.0
        %1139 = vmatprep.subr.mxu0 0.0
        %1140 = vmatpush1.msra.mxu0 0.0
        %1141 = vmatprep.subr.mxu0 0.0
        %1142 = vmatpush1.msra.mxu0 0.0
        %1143 = vmatprep.subr.mxu0 0.0
        %1144 = vmatpush1.msra.mxu0 0.0
        %1145 = vmatprep.subr.mxu0 0.0
        %1146 = vmatpush1.msra.mxu0 0.0
        %1147 = vmatprep.subr.mxu0 0.0
        %1148 = vmatpush1.msra.mxu0 0.0
        %1149 = vmatprep.subr.mxu0 0.0
        %1150 = vmatpush1.msra.mxu0 0.0
        %1151 = vmatprep.subr.mxu0 0.0
        %1152 = vmatpush1.msra.mxu0 0.0
        %1153 = vmatprep.subr.mxu0 0.0
        %1154 = vmatpush1.msra.mxu0 0.0
        %1155 = vmatprep.subr.mxu0 0.0
        %1156 = vmatpush1.msra.mxu0 0.0
        %1157 = vmatprep.subr.mxu0 0.0
        %1158 = vmatpush1.msra.mxu0 0.0
        %1159 = vmatprep.subr.mxu0 0.0
        %1160 = vmatpush1.msra.mxu0 0.0
        %1161 = vmatprep.subr.mxu0 0.0
        %1162 = vmatpush1.msra.mxu0 0.0
        %1163 = vmatprep.subr.mxu0 0.0
        %1164 = vmatpush1.msra.mxu0 0.0
        %1165 = vmatprep.subr.mxu0 0.0
        %1166 = vmatpush1.msra.mxu0 0.0
        %1167 = vmatprep.mubr.f32.mxu0 0.0
        %1168 = vmatmul.mubr.f32.gmra.mrb[0].mxu0 %v1101
        %v1169 = vpop.f32.mrb[0].mxu0
        %v1170 = vadd.f32 0.0, %v1169
        %v1171 = vpop.f32.mrb[0].mxu0
        %1172 = vdwg.mxu0
        %v1173 = vld [vmem:[#allocation2] sm:$0xff]
        %v1174 = vld [vmem:[%s745] sm:$0xff]
        %v1176 = vsel %vm1008, %v1170, 0
        %1178 = vmatprep.subr.mxu0 0.0
        %1179 = vmatpush1.msra.mxu0 %v1174
        %1180 = vmatprep.subr.mxu0 0.0
        %1181 = vmatpush1.msra.mxu0 0.0
        %1182 = vmatprep.subr.mxu0 0.0
        %1183 = vmatpush1.msra.mxu0 0.0
        %1184 = vmatprep.subr.mxu0 0.0
        %1185 = vmatpush1.msra.mxu0 0.0
        %1186 = vmatprep.subr.mxu0 0.0
        %1187 = vmatpush1.msra.mxu0 0.0
        %1188 = vmatprep.subr.mxu0 0.0
        %1189 = vmatpush1.msra.mxu0 0.0
        %1190 = vmatprep.subr.mxu0 0.0
        %1191 = vmatpush1.msra.mxu0 0.0
        %1192 = vmatprep.subr.mxu0 0.0
        %1193 = vmatpush1.msra.mxu0 0.0
        %1194 = vmatprep.subr.mxu0 0.0
        %1195 = vmatpush1.msra.mxu0 0.0
        %1196 = vmatprep.subr.mxu0 0.0
        %1197 = vmatpush1.msra.mxu0 0.0
        %1198 = vmatprep.subr.mxu0 0.0
        %1199 = vmatpush1.msra.mxu0 0.0
        %1200 = vmatprep.subr.mxu0 0.0
        %1201 = vmatpush1.msra.mxu0 0.0
        %1202 = vmatprep.subr.mxu0 0.0
        %1203 = vmatpush1.msra.mxu0 0.0
        %1204 = vmatprep.subr.mxu0 0.0
        %1205 = vmatpush1.msra.mxu0 0.0
        %1206 = vmatprep.subr.mxu0 0.0
        %1207 = vmatpush1.msra.mxu0 0.0
        %1208 = vmatprep.subr.mxu0 0.0
        %1209 = vmatpush1.msra.mxu0 0.0
        %1210 = vmatprep.subr.mxu0 0.0
        %1211 = vmatpush1.msra.mxu0 0.0
        %1212 = vmatprep.subr.mxu0 0.0
        %1213 = vmatpush1.msra.mxu0 0.0
        %1214 = vmatprep.subr.mxu0 0.0
        %1215 = vmatpush1.msra.mxu0 0.0
        %1216 = vmatprep.subr.mxu0 0.0
        %1217 = vmatpush1.msra.mxu0 0.0
        %1218 = vmatprep.subr.mxu0 0.0
        %1219 = vmatpush1.msra.mxu0 0.0
        %1220 = vmatprep.subr.mxu0 0.0
        %1221 = vmatpush1.msra.mxu0 0.0
        %1222 = vmatprep.subr.mxu0 0.0
        %1223 = vmatpush1.msra.mxu0 0.0
        %1224 = vmatprep.subr.mxu0 0.0
        %1225 = vmatpush1.msra.mxu0 0.0
        %1226 = vmatprep.subr.mxu0 0.0
        %1227 = vmatpush1.msra.mxu0 0.0
        %1228 = vmatprep.subr.mxu0 0.0
        %1229 = vmatpush1.msra.mxu0 0.0
        %1230 = vmatprep.subr.mxu0 0.0
        %1231 = vmatpush1.msra.mxu0 0.0
        %1232 = vmatprep.subr.mxu0 0.0
        %1233 = vmatpush1.msra.mxu0 0.0
        %1234 = vmatprep.subr.mxu0 0.0
        %1235 = vmatpush1.msra.mxu0 0.0
        %1236 = vmatprep.subr.mxu0 0.0
        %1237 = vmatpush1.msra.mxu0 0.0
        %1238 = vmatprep.subr.mxu0 0.0
        %1239 = vmatpush1.msra.mxu0 0.0
        %1240 = vmatprep.subr.mxu0 0.0
        %1241 = vmatpush1.msra.mxu0 0.0
        %1242 = vmatprep.mubr.f32.mxu0 0.0
        %1243 = vmatmul.mubr.f32.gmra.mrb[0].mxu0 %v1176
        %v1244 = vpop.f32.mrb[0].mxu0
        %v1245 = vadd.f32 0.0, %v1244
        %v1246 = vpop.f32.mrb[0].mxu0
        %1247 = vdwg.mxu0
        %v1248 = vadd.f32 %v1173, %v1245
        %1249 = vst.msk [vmem:[#allocation2] sm:$0xff] %vm761, %v1248
        %p1250 = scmp.eq.s32.totalorder %s50, 3
        // Predicated region
        $region105: #{tpu_custom_call.1} parent=63 // pred_check
          %p1251 = pneg %p1250
        $region106: #{tpu_custom_call.1} parent=63 // pred_check_branch
          %1253 = sbr.rel (%p1251) target = $region108
        $region107: #{tpu_custom_call.1} parent=63 // pred_region
          %v1254 = vld [vmem:[#allocation2] sm:$0xff]
          %v1255 = vld [vmem:[%s10] sm:$0x1]
          %v1257 = vlaneseq
          %v1258 = vshrl.u32 %v1257, 7
          %v1259 = vsub.s32 0, %v1258
          %v1260 = vrot.slane %v1255, %v1259
          %v1262 = vadd.f32 %v1254, %v1260
          %1263 = vst.msk [vmem:[%s734] sm:$0xff] %vm761, %v1262
        $region108: #{tpu_custom_call.1} parent=63 // pred_fallthru
          _
        %s1264 = sand.u32 %s346, 1
        %s1265 = scalar_lea.sflag [#allocation5], %s1264
        %s1266 = sand.u32 %s346, 1
        %s1267 = smul.addr %s1266, 8
        %s1268 = scalar_lea.vmem [#allocation18], %s1267
        %s1269 = sand.u32 %s374, 1
        %s1270 = scalar_lea.sflag [#allocation20], %s1269
        %s1271 = sand.u32 %s374, 1
        %s1272 = smul.addr %s1271, 8
        %s1273 = scalar_lea.vmem [#allocation19], %s1272
        // Predicated region
        $region109: #{tpu_custom_call.1} parent=63 // pred_check
          %p1274 = pneg %p356
        $region110: #{tpu_custom_call.1} parent=63 // pred_check_branch
          %1276 = sbr.rel (%p1274) target = $region112
        $region111: #{tpu_custom_call.1} parent=63 // pred_region
          %s1278 = ssub.s32 128, 128
          %1279 = vsyncadd %s1265, %s1278
          %s1280 = smul.addr %s49, 128
          %s1281 = scalar_lea.hbm %s11, %s1280
          %s1283 = sshll.u32 %s1268, 4
          %s1284 = int_to_ptr.vmem [resolvable:$true] %s1283
          %1286 = dma.vmem_to_hbm [thread:$0]  %s1284, 128, %s1281, %s1265
        $region112: #{tpu_custom_call.1} parent=63 // pred_fallthru
          _
        // Predicated region
        $region113: #{tpu_custom_call.1} parent=63 // pred_check
          %p1287 = pneg %p384
        $region114: #{tpu_custom_call.1} parent=63 // pred_check_branch
          %1289 = sbr.rel (%p1287) target = $region116
        $region115: #{tpu_custom_call.1} parent=63 // pred_region
          %s1291 = ssub.s32 128, 128
          %1292 = vsyncadd %s1270, %s1291
          %s1293 = smul.addr %s49, 4
          %s1294 = sadd.s32 %s50, %s1293
          %s1295 = smul.addr %s1294, 128
          %s1296 = scalar_lea.hbm %s12, %s1295
          %s1298 = sshll.u32 %s1273, 4
          %s1299 = int_to_ptr.vmem [resolvable:$true] %s1298
          %1301 = dma.vmem_to_hbm [thread:$0]  %s1299, 128, %s1296, %s1270
        $region116: #{tpu_custom_call.1} parent=63 // pred_fallthru
          _
      $region64: #{tpu_custom_call.1} parent=5 // pred_fallthru
        _
      %p1302 = scmp.le.s32.totalorder 2, %s40
      // Predicated region
      $region117: #{tpu_custom_call.1} parent=5 // pred_check
        %p1303 = pneg %p1302
      $region118: #{tpu_custom_call.1} parent=5 // pred_check_branch
        %1305 = sbr.rel (%p1303) target = $region120
      $region119: #{tpu_custom_call.1} parent=5 // pred_region
        %s1306 = ssub.s32 %s40, 2
        // Predicated region
        $region121: #{tpu_custom_call.1} parent=119 // pred_check
          %p1307 = pneg %p362
        $region122: #{tpu_custom_call.1} parent=119 // pred_check_branch
          %1309 = sbr.rel (%p1307) target = $region124
        $region123: #{tpu_custom_call.1} parent=119 // pred_region
          %s1310 = sand.u32 %s347, 1
          %s1311 = scalar_lea.sflag [#allocation5], %s1310
          %s1312 = sand.u32 %s347, 1
          %s1313 = smul.addr %s1312, 8
          %s1314 = scalar_lea.vmem [#allocation18], %s1313
          %1315 = dma.done %s1311, 128
        $region124: #{tpu_custom_call.1} parent=119 // pred_fallthru
          _
        // Predicated region
        $region125: #{tpu_custom_call.1} parent=119 // pred_check
          %p1316 = pneg %p390
        $region126: #{tpu_custom_call.1} parent=119 // pred_check_branch
          %1318 = sbr.rel (%p1316) target = $region128
        $region127: #{tpu_custom_call.1} parent=119 // pred_region
          %s1319 = sand.u32 %s375, 1
          %s1320 = scalar_lea.sflag [#allocation20], %s1319
          %s1321 = sand.u32 %s375, 1
          %s1322 = smul.addr %s1321, 8
          %s1323 = scalar_lea.vmem [#allocation19], %s1322
          %1324 = dma.done %s1320, 128
        $region128: #{tpu_custom_call.1} parent=119 // pred_fallthru
          _
      $region120: #{tpu_custom_call.1} parent=5 // pred_fallthru
        _
    $region6: #{tpu_custom_call.1} parent=1 // loop_footer
      %s44 = sadd.s32 1, %s40
    $region7: #{tpu_custom_call.1} parent=1 // loop_footer_branch
      %39 = sbr.rel target = $region3
    $region8: #{tpu_custom_call.1} parent=1 // loop_exit
      _
    %1325 = vsyncpa [#allocation4], 1
    %s1326 = scalar_lea.sflag [#allocation4], 1
    %1327 = vsyncpa %s1326, 1
    %1328 = vsyncpa [#allocation7], 1
    %s1329 = scalar_lea.sflag [#allocation7], 1
    %1330 = vsyncpa %s1329, 1
    %1331 = vsyncpa [#allocation10], 1
    %s1332 = scalar_lea.sflag [#allocation10], 1
    %1333 = vsyncpa %s1332, 1
    %1334 = vsyncpa [#allocation13], 1
    %s1335 = scalar_lea.sflag [#allocation13], 1
    %1336 = vsyncpa %s1335, 1
    %1337 = vsyncpa [#allocation16], 1
    %s1338 = scalar_lea.sflag [#allocation16], 1
    %1339 = vsyncpa %s1338, 1
    %1340 = vsyncpa [#allocation5], 1
    %s1341 = scalar_lea.sflag [#allocation5], 1
    %1342 = vsyncpa %s1341, 1
    %1343 = vsyncpa [#allocation20], 1
    %s1344 = scalar_lea.sflag [#allocation20], 1
    %1345 = vsyncpa %s1344, 1

</llo_original>
